<compile_context>
chip_gen: v6e
topology: v6e:2x2x1
jax: 0.10.0
libtpu: 0.0.40
codegen_flags: <defaults>
</compile_context>

<pallas_src>
import functools

import jax
import jax.numpy as jnp
from jax.experimental import pallas as pl
from jax.experimental.pallas import tpu as pltpu


def _round_up(x, m):
    return (x + m - 1) // m * m


def lstm_kernel(x_ref, h0_ref, c0_ref, wih_ref, whh_ref, b_ref,
                wlin_ref, blin_ref, out_ref, *, seq_len, hp):
    # Prologue: batched input projection for every timestep in one MXU pass.
    #   xproj[t] = x[t] @ W_ih^T + (b_ih + b_hh)        -> (seq_len, 4*HP) f32
    xproj = (jnp.dot(x_ref[...], wih_ref[...],
                     preferred_element_type=jnp.float32)
             + b_ref[...])

    whh = whh_ref[...]              # (HP, 4*HP) bf16, loaded once
    h = h0_ref[...]                 # (1, HP) f32 carry (pad lanes are 0)
    c = c0_ref[...]                 # (1, HP) f32 carry (pad lanes are 0)

    # Short, statically unrolled recurrence (seq_len is small and static).
    for t in range(seq_len):
        gates = xproj[t:t + 1, :] + jnp.dot(
            h.astype(whh.dtype), whh, preferred_element_type=jnp.float32)
        # Gate slices are whole 128-lane vreg-aligned slices because each gate
        # is padded to HP lanes in the weight layout.  Pad lanes carry 0 in
        # the pre-activations, so i=f=o=0.5, g=0 there and h/c pad lanes stay 0.
        i_g = jax.nn.sigmoid(gates[:, 0 * hp:1 * hp])
        f_g = jax.nn.sigmoid(gates[:, 1 * hp:2 * hp])
        g_g = jnp.tanh(gates[:, 2 * hp:3 * hp])
        o_g = jax.nn.sigmoid(gates[:, 3 * hp:4 * hp])
        c = f_g * c + i_g * g_g
        h = o_g * jnp.tanh(c)

    # Final linear projection of the last hidden state == predictions[-1].
    out_ref[...] = (jnp.dot(h.astype(wlin_ref.dtype), wlin_ref[...],
                            preferred_element_type=jnp.float32)
                    + blin_ref[...])


def lstm_forward(x, h0, c0, w_ih, w_hh, b_ih, b_hh, w_lin, b_lin):
    """x: (seq_len, input_size). Returns (output_size,) == predictions[-1]."""
    seq_len, input_size = x.shape
    hidden_size = w_hh.shape[1]
    output_size = w_lin.shape[0]

    f32, bf16 = jnp.float32, jnp.bfloat16
    HP = _round_up(hidden_size, 128)     # per-gate lane-padded hidden width
    IP = _round_up(input_size, 128)      # lane-padded input width
    OP = _round_up(output_size, 128)     # lane-padded output width

    # x padded along the feature axis; bf16 for the MXU.
    x_p = jnp.zeros((seq_len, IP), bf16).at[:, :input_size].set(
        x.astype(bf16))

    # Gate-major, lane-aligned weight layout: gate k occupies lanes
    # [k*HP, k*HP + hidden_size) of the 4*HP output axis; everything else 0.
    def pad_gates(w, in_dim, in_pad):
        # w: (4*hidden_size, in_dim)  ->  (in_pad, 4*HP) transposed + padded.
        w4 = w.reshape(4, hidden_size, in_dim)
        out = jnp.zeros((in_pad, 4 * HP), bf16)
        for k in range(4):
            out = out.at[:in_dim, k * HP:k * HP + hidden_size].set(
                jnp.transpose(w4[k]).astype(bf16))
        return out

    wih_p = pad_gates(w_ih, input_size, IP)           # (IP, 4*HP) bf16
    whh_p = pad_gates(w_hh, hidden_size, HP)          # (HP, 4*HP) bf16

    b4 = (b_ih + b_hh).reshape(4, hidden_size).astype(f32)
    b_p = jnp.zeros((1, 4 * HP), f32)
    for k in range(4):
        b_p = b_p.at[0, k * HP:k * HP + hidden_size].set(b4[k])

    h0_p = jnp.zeros((1, HP), f32).at[:, :hidden_size].set(
        h0.reshape(1, hidden_size).astype(f32))
    c0_p = jnp.zeros((1, HP), f32).at[:, :hidden_size].set(
        c0.reshape(1, hidden_size).astype(f32))

    wlin_p = jnp.zeros((HP, OP), bf16).at[:hidden_size, :output_size].set(
        jnp.transpose(w_lin).astype(bf16))
    blin_p = jnp.zeros((1, OP), f32).at[0, :output_size].set(
        b_lin.astype(f32))

    const = lambda shape: pl.BlockSpec(shape, lambda i: tuple(0 for _ in shape))

    out = pl.pallas_call(
        functools.partial(lstm_kernel, seq_len=seq_len, hp=HP),
        out_shape=jax.ShapeDtypeStruct((1, OP), f32),
        grid_spec=pltpu.PrefetchScalarGridSpec(
            num_scalar_prefetch=0,
            grid=(1,),                                    # single grid step
            in_specs=[
                const((seq_len, IP)),                     # x      (bf16)
                const((1, HP)),                           # h0     (f32)
                const((1, HP)),                           # c0     (f32)
                const((IP, 4 * HP)),                      # W_ih^T (bf16)
                const((HP, 4 * HP)),                      # W_hh^T (bf16)
                const((1, 4 * HP)),                       # bias   (f32)
                const((HP, OP)),                          # W_lin^T(bf16)
                const((1, OP)),                           # b_lin  (f32)
            ],
            out_specs=const((1, OP)),
        ),
        compiler_params=pltpu.CompilerParams(
            dimension_semantics=("arbitrary",),
            vmem_limit_bytes=32 * 1024 * 1024),
    )(x_p, h0_p, c0_p, wih_p, whh_p, b_p, wlin_p, blin_p)

    return out[0, :output_size]


def lstm_reference(x, h0, c0, w_ih, w_hh, b_ih, b_hh, w_lin, b_lin):
    """Pure-JAX fp32 reference matching torch.nn.LSTM semantics (batch=1)."""
    H = w_hh.shape[1]
    h = h0.reshape(1, H)
    c = c0.reshape(1, H)
    for t in range(x.shape[0]):
        xt = x[t].reshape(1, -1)
        gates = xt @ w_ih.T + h @ w_hh.T + b_ih + b_hh
        i = jax.nn.sigmoid(gates[:, 0 * H:1 * H])
        f = jax.nn.sigmoid(gates[:, 1 * H:2 * H])
        g = jnp.tanh(gates[:, 2 * H:3 * H])
        o = jax.nn.sigmoid(gates[:, 3 * H:4 * H])
        c = f * c + i * g
        h = o * jnp.tanh(c)
    return (h @ w_lin.T + b_lin)[0]


if __name__ == "__main__":
    # Small shapes consistent with the module (single layer, batch=1).
    seq_len, input_size, hidden_size, output_size = 8, 2, 32, 1

    key = jax.random.PRNGKey(0)
    keys = jax.random.split(key, 8)
    bound = 1.0 / jnp.sqrt(hidden_size)

    x = jax.random.normal(keys[0], (seq_len, input_size), jnp.float32)
    w_ih = jax.random.uniform(keys[1], (4 * hidden_size, input_size),
                              jnp.float32, -bound, bound)
    w_hh = jax.random.uniform(keys[2], (4 * hidden_size, hidden_size),
                              jnp.float32, -bound, bound)
    b_ih = jax.random.uniform(keys[3], (4 * hidden_size,),
                              jnp.float32, -bound, bound)
    b_hh = jax.random.uniform(keys[4], (4 * hidden_size,),
                              jnp.float32, -bound, bound)
    w_lin = jax.random.uniform(keys[5], (output_size, hidden_size),
                               jnp.float32, -bound, bound)
    b_lin = jax.random.uniform(keys[6], (output_size,),
                               jnp.float32, -bound, bound)
    # hidden_cell is supplied externally in the PyTorch module; use zeros.
    h0 = jnp.zeros((1, 1, hidden_size), jnp.float32)
    c0 = jnp.zeros((1, 1, hidden_size), jnp.float32)

    out = lstm_forward(x, h0, c0, w_ih, w_hh, b_ih, b_hh, w_lin, b_lin)
    out = jax.block_until_ready(out)

    ref = lstm_reference(x, h0, c0, w_ih, w_hh, b_ih, b_hh, w_lin, b_lin)
    assert out.shape == (output_size,)
    # Matmul operands are bf16 (fp32 accumulation), so compare against the
    # fp32 reference with a bf16-appropriate tolerance.
    assert jnp.allclose(out, ref, atol=3e-2, rtol=3e-2), (out, ref)
    print("KERNEL_OK")
</pallas_src>

<mosaic_0001>
module attributes {stable_mosaic.version = 11 : i64} {
  func.func @lstm_kernel(%arg0: i32, %arg1: memref<8x128xbf16, #tpu.memory_space<vmem>>, %arg2: memref<1x128xf32, #tpu.memory_space<vmem>>, %arg3: memref<1x128xf32, #tpu.memory_space<vmem>>, %arg4: memref<128x512xbf16, #tpu.memory_space<vmem>>, %arg5: memref<128x512xbf16, #tpu.memory_space<vmem>>, %arg6: memref<1x512xf32, #tpu.memory_space<vmem>>, %arg7: memref<128x128xbf16, #tpu.memory_space<vmem>>, %arg8: memref<1x128xf32, #tpu.memory_space<vmem>>, %arg9: memref<1x128xf32, #tpu.memory_space<vmem>>) attributes {dimension_semantics = [#tpu.dimension_semantics<arbitrary>], iteration_bounds = array<i64: 1>, scalar_prefetch = 0 : i64, scratch_operands = 0 : i64, tpu.core_type = #tpu.core_type<tc>, window_params = [{pipeline_mode = #tpu.pipeline_mode<synchronous>, transform_indices = @transform_0, window_bounds = array<i64: 8, 128>}, {pipeline_mode = #tpu.pipeline_mode<synchronous>, transform_indices = @transform_1, window_bounds = array<i64: 1, 128>}, {pipeline_mode = #tpu.pipeline_mode<synchronous>, transform_indices = @transform_2, window_bounds = array<i64: 1, 128>}, {pipeline_mode = #tpu.pipeline_mode<synchronous>, transform_indices = @transform_3, window_bounds = array<i64: 128, 512>}, {pipeline_mode = #tpu.pipeline_mode<synchronous>, transform_indices = @transform_4, window_bounds = array<i64: 128, 512>}, {pipeline_mode = #tpu.pipeline_mode<synchronous>, transform_indices = @transform_5, window_bounds = array<i64: 1, 512>}, {pipeline_mode = #tpu.pipeline_mode<synchronous>, transform_indices = @transform_6, window_bounds = array<i64: 128, 128>}, {pipeline_mode = #tpu.pipeline_mode<synchronous>, transform_indices = @transform_7, window_bounds = array<i64: 1, 128>}, {pipeline_mode = #tpu.pipeline_mode<synchronous>, transform_indices = @transform_8, window_bounds = array<i64: 1, 128>}]} {
    %c0 = arith.constant 0 : index
    %c0_0 = arith.constant 0 : index
    %0 = vector.load %arg1[%c0, %c0_0] : memref<8x128xbf16, #tpu.memory_space<vmem>>, vector<8x128xbf16>
    %c0_1 = arith.constant 0 : index
    %c0_2 = arith.constant 0 : index
    %1 = vector.load %arg4[%c0_1, %c0_2] : memref<128x512xbf16, #tpu.memory_space<vmem>>, vector<128x512xbf16>
    %cst = arith.constant dense<0.000000e+00> : vector<8x512xf32>
    %2 = tpu.matmul %0, %1, %cst {dimension_numbers = #tpu.dot_dimension_numbers<[1], [0], [0], [1], [0, 0, 1, 1], [], []>} : vector<8x128xbf16>, vector<128x512xbf16>, vector<8x512xf32> -> vector<8x512xf32>
    %c0_3 = arith.constant 0 : index
    %c0_4 = arith.constant 0 : index
    %3 = vector.load %arg6[%c0_3, %c0_4] : memref<1x512xf32, #tpu.memory_space<vmem>>, vector<1x512xf32>
    %4 = vector.broadcast %3 : vector<1x512xf32> to vector<8x512xf32>
    %5 = arith.addf %2, %4 : vector<8x512xf32>
    %c0_5 = arith.constant 0 : index
    %c0_6 = arith.constant 0 : index
    %6 = vector.load %arg5[%c0_5, %c0_6] : memref<128x512xbf16, #tpu.memory_space<vmem>>, vector<128x512xbf16>
    %c0_7 = arith.constant 0 : index
    %c0_8 = arith.constant 0 : index
    %7 = vector.load %arg2[%c0_7, %c0_8] : memref<1x128xf32, #tpu.memory_space<vmem>>, vector<1x128xf32>
    %c0_9 = arith.constant 0 : index
    %c0_10 = arith.constant 0 : index
    %8 = vector.load %arg3[%c0_9, %c0_10] : memref<1x128xf32, #tpu.memory_space<vmem>>, vector<1x128xf32>
    %9 = vector.extract_strided_slice %5 {offsets = [0, 0], sizes = [1, 512], strides = [1, 1]} : vector<8x512xf32> to vector<1x512xf32>
    %10 = arith.truncf %7 : vector<1x128xf32> to vector<1x128xbf16>
    %cst_11 = arith.constant dense<0.000000e+00> : vector<1x512xf32>
    %11 = tpu.matmul %10, %6, %cst_11 {dimension_numbers = #tpu.dot_dimension_numbers<[1], [0], [0], [1], [0, 0, 1, 1], [], []>} : vector<1x128xbf16>, vector<128x512xbf16>, vector<1x512xf32> -> vector<1x512xf32>
    %12 = arith.addf %9, %11 : vector<1x512xf32>
    %13 = vector.extract_strided_slice %12 {offsets = [0, 0], sizes = [1, 128], strides = [1, 1]} : vector<1x512xf32> to vector<1x128xf32>
    %14 = arith.negf %13 : vector<1x128xf32>
    %15 = math.exp %14 : vector<1x128xf32>
    %cst_12 = arith.constant 1.000000e+00 : f32
    %16 = vector.broadcast %cst_12 : f32 to vector<1x128xf32>
    %17 = arith.addf %16, %15 : vector<1x128xf32>
    %18 = arith.divf %16, %17 : vector<1x128xf32>
    %19 = vector.extract_strided_slice %12 {offsets = [0, 128], sizes = [1, 128], strides = [1, 1]} : vector<1x512xf32> to vector<1x128xf32>
    %20 = arith.negf %19 : vector<1x128xf32>
    %21 = math.exp %20 : vector<1x128xf32>
    %cst_13 = arith.constant 1.000000e+00 : f32
    %22 = vector.broadcast %cst_13 : f32 to vector<1x128xf32>
    %23 = arith.addf %22, %21 : vector<1x128xf32>
    %24 = arith.divf %22, %23 : vector<1x128xf32>
    %25 = vector.extract_strided_slice %12 {offsets = [0, 256], sizes = [1, 128], strides = [1, 1]} : vector<1x512xf32> to vector<1x128xf32>
    %26 = math.tanh %25 : vector<1x128xf32>
    %27 = vector.extract_strided_slice %12 {offsets = [0, 384], sizes = [1, 128], strides = [1, 1]} : vector<1x512xf32> to vector<1x128xf32>
    %28 = arith.negf %27 : vector<1x128xf32>
    %29 = math.exp %28 : vector<1x128xf32>
    %cst_14 = arith.constant 1.000000e+00 : f32
    %30 = vector.broadcast %cst_14 : f32 to vector<1x128xf32>
    %31 = arith.addf %30, %29 : vector<1x128xf32>
    %32 = arith.divf %30, %31 : vector<1x128xf32>
    %33 = arith.mulf %24, %8 : vector<1x128xf32>
    %34 = arith.mulf %18, %26 : vector<1x128xf32>
    %35 = arith.addf %33, %34 : vector<1x128xf32>
    %36 = math.tanh %35 : vector<1x128xf32>
    %37 = arith.mulf %32, %36 : vector<1x128xf32>
    %38 = vector.extract_strided_slice %5 {offsets = [1, 0], sizes = [1, 512], strides = [1, 1]} : vector<8x512xf32> to vector<1x512xf32>
    %39 = arith.truncf %37 : vector<1x128xf32> to vector<1x128xbf16>
    %cst_15 = arith.constant dense<0.000000e+00> : vector<1x512xf32>
    %40 = tpu.matmul %39, %6, %cst_15 {dimension_numbers = #tpu.dot_dimension_numbers<[1], [0], [0], [1], [0, 0, 1, 1], [], []>} : vector<1x128xbf16>, vector<128x512xbf16>, vector<1x512xf32> -> vector<1x512xf32>
    %41 = arith.addf %38, %40 : vector<1x512xf32>
    %42 = vector.extract_strided_slice %41 {offsets = [0, 0], sizes = [1, 128], strides = [1, 1]} : vector<1x512xf32> to vector<1x128xf32>
    %43 = arith.negf %42 : vector<1x128xf32>
    %44 = math.exp %43 : vector<1x128xf32>
    %cst_16 = arith.constant 1.000000e+00 : f32
    %45 = vector.broadcast %cst_16 : f32 to vector<1x128xf32>
    %46 = arith.addf %45, %44 : vector<1x128xf32>
    %47 = arith.divf %45, %46 : vector<1x128xf32>
    %48 = vector.extract_strided_slice %41 {offsets = [0, 128], sizes = [1, 128], strides = [1, 1]} : vector<1x512xf32> to vector<1x128xf32>
    %49 = arith.negf %48 : vector<1x128xf32>
    %50 = math.exp %49 : vector<1x128xf32>
    %cst_17 = arith.constant 1.000000e+00 : f32
    %51 = vector.broadcast %cst_17 : f32 to vector<1x128xf32>
    %52 = arith.addf %51, %50 : vector<1x128xf32>
    %53 = arith.divf %51, %52 : vector<1x128xf32>
    %54 = vector.extract_strided_slice %41 {offsets = [0, 256], sizes = [1, 128], strides = [1, 1]} : vector<1x512xf32> to vector<1x128xf32>
    %55 = math.tanh %54 : vector<1x128xf32>
    %56 = vector.extract_strided_slice %41 {offsets = [0, 384], sizes = [1, 128], strides = [1, 1]} : vector<1x512xf32> to vector<1x128xf32>
    %57 = arith.negf %56 : vector<1x128xf32>
    %58 = math.exp %57 : vector<1x128xf32>
    %cst_18 = arith.constant 1.000000e+00 : f32
    %59 = vector.broadcast %cst_18 : f32 to vector<1x128xf32>
    %60 = arith.addf %59, %58 : vector<1x128xf32>
    %61 = arith.divf %59, %60 : vector<1x128xf32>
    %62 = arith.mulf %53, %35 : vector<1x128xf32>
    %63 = arith.mulf %47, %55 : vector<1x128xf32>
    %64 = arith.addf %62, %63 : vector<1x128xf32>
    %65 = math.tanh %64 : vector<1x128xf32>
    %66 = arith.mulf %61, %65 : vector<1x128xf32>
    %67 = vector.extract_strided_slice %5 {offsets = [2, 0], sizes = [1, 512], strides = [1, 1]} : vector<8x512xf32> to vector<1x512xf32>
    %68 = arith.truncf %66 : vector<1x128xf32> to vector<1x128xbf16>
    %cst_19 = arith.constant dense<0.000000e+00> : vector<1x512xf32>
    %69 = tpu.matmul %68, %6, %cst_19 {dimension_numbers = #tpu.dot_dimension_numbers<[1], [0], [0], [1], [0, 0, 1, 1], [], []>} : vector<1x128xbf16>, vector<128x512xbf16>, vector<1x512xf32> -> vector<1x512xf32>
    %70 = arith.addf %67, %69 : vector<1x512xf32>
    %71 = vector.extract_strided_slice %70 {offsets = [0, 0], sizes = [1, 128], strides = [1, 1]} : vector<1x512xf32> to vector<1x128xf32>
    %72 = arith.negf %71 : vector<1x128xf32>
    %73 = math.exp %72 : vector<1x128xf32>
    %cst_20 = arith.constant 1.000000e+00 : f32
    %74 = vector.broadcast %cst_20 : f32 to vector<1x128xf32>
    %75 = arith.addf %74, %73 : vector<1x128xf32>
    %76 = arith.divf %74, %75 : vector<1x128xf32>
    %77 = vector.extract_strided_slice %70 {offsets = [0, 128], sizes = [1, 128], strides = [1, 1]} : vector<1x512xf32> to vector<1x128xf32>
    %78 = arith.negf %77 : vector<1x128xf32>
    %79 = math.exp %78 : vector<1x128xf32>
    %cst_21 = arith.constant 1.000000e+00 : f32
    %80 = vector.broadcast %cst_21 : f32 to vector<1x128xf32>
    %81 = arith.addf %80, %79 : vector<1x128xf32>
    %82 = arith.divf %80, %81 : vector<1x128xf32>
    %83 = vector.extract_strided_slice %70 {offsets = [0, 256], sizes = [1, 128], strides = [1, 1]} : vector<1x512xf32> to vector<1x128xf32>
    %84 = math.tanh %83 : vector<1x128xf32>
    %85 = vector.extract_strided_slice %70 {offsets = [0, 384], sizes = [1, 128], strides = [1, 1]} : vector<1x512xf32> to vector<1x128xf32>
    %86 = arith.negf %85 : vector<1x128xf32>
    %87 = math.exp %86 : vector<1x128xf32>
    %cst_22 = arith.constant 1.000000e+00 : f32
    %88 = vector.broadcast %cst_22 : f32 to vector<1x128xf32>
    %89 = arith.addf %88, %87 : vector<1x128xf32>
    %90 = arith.divf %88, %89 : vector<1x128xf32>
    %91 = arith.mulf %82, %64 : vector<1x128xf32>
    %92 = arith.mulf %76, %84 : vector<1x128xf32>
    %93 = arith.addf %91, %92 : vector<1x128xf32>
    %94 = math.tanh %93 : vector<1x128xf32>
    %95 = arith.mulf %90, %94 : vector<1x128xf32>
    %96 = vector.extract_strided_slice %5 {offsets = [3, 0], sizes = [1, 512], strides = [1, 1]} : vector<8x512xf32> to vector<1x512xf32>
    %97 = arith.truncf %95 : vector<1x128xf32> to vector<1x128xbf16>
    %cst_23 = arith.constant dense<0.000000e+00> : vector<1x512xf32>
    %98 = tpu.matmul %97, %6, %cst_23 {dimension_numbers = #tpu.dot_dimension_numbers<[1], [0], [0], [1], [0, 0, 1, 1], [], []>} : vector<1x128xbf16>, vector<128x512xbf16>, vector<1x512xf32> -> vector<1x512xf32>
    %99 = arith.addf %96, %98 : vector<1x512xf32>
    %100 = vector.extract_strided_slice %99 {offsets = [0, 0], sizes = [1, 128], strides = [1, 1]} : vector<1x512xf32> to vector<1x128xf32>
    %101 = arith.negf %100 : vector<1x128xf32>
    %102 = math.exp %101 : vector<1x128xf32>
    %cst_24 = arith.constant 1.000000e+00 : f32
    %103 = vector.broadcast %cst_24 : f32 to vector<1x128xf32>
    %104 = arith.addf %103, %102 : vector<1x128xf32>
    %105 = arith.divf %103, %104 : vector<1x128xf32>
    %106 = vector.extract_strided_slice %99 {offsets = [0, 128], sizes = [1, 128], strides = [1, 1]} : vector<1x512xf32> to vector<1x128xf32>
    %107 = arith.negf %106 : vector<1x128xf32>
    %108 = math.exp %107 : vector<1x128xf32>
    %cst_25 = arith.constant 1.000000e+00 : f32
    %109 = vector.broadcast %cst_25 : f32 to vector<1x128xf32>
    %110 = arith.addf %109, %108 : vector<1x128xf32>
    %111 = arith.divf %109, %110 : vector<1x128xf32>
    %112 = vector.extract_strided_slice %99 {offsets = [0, 256], sizes = [1, 128], strides = [1, 1]} : vector<1x512xf32> to vector<1x128xf32>
    %113 = math.tanh %112 : vector<1x128xf32>
    %114 = vector.extract_strided_slice %99 {offsets = [0, 384], sizes = [1, 128], strides = [1, 1]} : vector<1x512xf32> to vector<1x128xf32>
    %115 = arith.negf %114 : vector<1x128xf32>
    %116 = math.exp %115 : vector<1x128xf32>
    %cst_26 = arith.constant 1.000000e+00 : f32
    %117 = vector.broadcast %cst_26 : f32 to vector<1x128xf32>
    %118 = arith.addf %117, %116 : vector<1x128xf32>
    %119 = arith.divf %117, %118 : vector<1x128xf32>
    %120 = arith.mulf %111, %93 : vector<1x128xf32>
    %121 = arith.mulf %105, %113 : vector<1x128xf32>
    %122 = arith.addf %120, %121 : vector<1x128xf32>
    %123 = math.tanh %122 : vector<1x128xf32>
    %124 = arith.mulf %119, %123 : vector<1x128xf32>
    %125 = vector.extract_strided_slice %5 {offsets = [4, 0], sizes = [1, 512], strides = [1, 1]} : vector<8x512xf32> to vector<1x512xf32>
    %126 = arith.truncf %124 : vector<1x128xf32> to vector<1x128xbf16>
    %cst_27 = arith.constant dense<0.000000e+00> : vector<1x512xf32>
    %127 = tpu.matmul %126, %6, %cst_27 {dimension_numbers = #tpu.dot_dimension_numbers<[1], [0], [0], [1], [0, 0, 1, 1], [], []>} : vector<1x128xbf16>, vector<128x512xbf16>, vector<1x512xf32> -> vector<1x512xf32>
    %128 = arith.addf %125, %127 : vector<1x512xf32>
    %129 = vector.extract_strided_slice %128 {offsets = [0, 0], sizes = [1, 128], strides = [1, 1]} : vector<1x512xf32> to vector<1x128xf32>
    %130 = arith.negf %129 : vector<1x128xf32>
    %131 = math.exp %130 : vector<1x128xf32>
    %cst_28 = arith.constant 1.000000e+00 : f32
    %132 = vector.broadcast %cst_28 : f32 to vector<1x128xf32>
    %133 = arith.addf %132, %131 : vector<1x128xf32>
    %134 = arith.divf %132, %133 : vector<1x128xf32>
    %135 = vector.extract_strided_slice %128 {offsets = [0, 128], sizes = [1, 128], strides = [1, 1]} : vector<1x512xf32> to vector<1x128xf32>
    %136 = arith.negf %135 : vector<1x128xf32>
    %137 = math.exp %136 : vector<1x128xf32>
    %cst_29 = arith.constant 1.000000e+00 : f32
    %138 = vector.broadcast %cst_29 : f32 to vector<1x128xf32>
    %139 = arith.addf %138, %137 : vector<1x128xf32>
    %140 = arith.divf %138, %139 : vector<1x128xf32>
    %141 = vector.extract_strided_slice %128 {offsets = [0, 256], sizes = [1, 128], strides = [1, 1]} : vector<1x512xf32> to vector<1x128xf32>
    %142 = math.tanh %141 : vector<1x128xf32>
    %143 = vector.extract_strided_slice %128 {offsets = [0, 384], sizes = [1, 128], strides = [1, 1]} : vector<1x512xf32> to vector<1x128xf32>
    %144 = arith.negf %143 : vector<1x128xf32>
    %145 = math.exp %144 : vector<1x128xf32>
    %cst_30 = arith.constant 1.000000e+00 : f32
    %146 = vector.broadcast %cst_30 : f32 to vector<1x128xf32>
    %147 = arith.addf %146, %145 : vector<1x128xf32>
    %148 = arith.divf %146, %147 : vector<1x128xf32>
    %149 = arith.mulf %140, %122 : vector<1x128xf32>
    %150 = arith.mulf %134, %142 : vector<1x128xf32>
    %151 = arith.addf %149, %150 : vector<1x128xf32>
    %152 = math.tanh %151 : vector<1x128xf32>
    %153 = arith.mulf %148, %152 : vector<1x128xf32>
    %154 = vector.extract_strided_slice %5 {offsets = [5, 0], sizes = [1, 512], strides = [1, 1]} : vector<8x512xf32> to vector<1x512xf32>
    %155 = arith.truncf %153 : vector<1x128xf32> to vector<1x128xbf16>
    %cst_31 = arith.constant dense<0.000000e+00> : vector<1x512xf32>
    %156 = tpu.matmul %155, %6, %cst_31 {dimension_numbers = #tpu.dot_dimension_numbers<[1], [0], [0], [1], [0, 0, 1, 1], [], []>} : vector<1x128xbf16>, vector<128x512xbf16>, vector<1x512xf32> -> vector<1x512xf32>
    %157 = arith.addf %154, %156 : vector<1x512xf32>
    %158 = vector.extract_strided_slice %157 {offsets = [0, 0], sizes = [1, 128], strides = [1, 1]} : vector<1x512xf32> to vector<1x128xf32>
    %159 = arith.negf %158 : vector<1x128xf32>
    %160 = math.exp %159 : vector<1x128xf32>
    %cst_32 = arith.constant 1.000000e+00 : f32
    %161 = vector.broadcast %cst_32 : f32 to vector<1x128xf32>
    %162 = arith.addf %161, %160 : vector<1x128xf32>
    %163 = arith.divf %161, %162 : vector<1x128xf32>
    %164 = vector.extract_strided_slice %157 {offsets = [0, 128], sizes = [1, 128], strides = [1, 1]} : vector<1x512xf32> to vector<1x128xf32>
    %165 = arith.negf %164 : vector<1x128xf32>
    %166 = math.exp %165 : vector<1x128xf32>
    %cst_33 = arith.constant 1.000000e+00 : f32
    %167 = vector.broadcast %cst_33 : f32 to vector<1x128xf32>
    %168 = arith.addf %167, %166 : vector<1x128xf32>
    %169 = arith.divf %167, %168 : vector<1x128xf32>
    %170 = vector.extract_strided_slice %157 {offsets = [0, 256], sizes = [1, 128], strides = [1, 1]} : vector<1x512xf32> to vector<1x128xf32>
    %171 = math.tanh %170 : vector<1x128xf32>
    %172 = vector.extract_strided_slice %157 {offsets = [0, 384], sizes = [1, 128], strides = [1, 1]} : vector<1x512xf32> to vector<1x128xf32>
    %173 = arith.negf %172 : vector<1x128xf32>
    %174 = math.exp %173 : vector<1x128xf32>
    %cst_34 = arith.constant 1.000000e+00 : f32
    %175 = vector.broadcast %cst_34 : f32 to vector<1x128xf32>
    %176 = arith.addf %175, %174 : vector<1x128xf32>
    %177 = arith.divf %175, %176 : vector<1x128xf32>
    %178 = arith.mulf %169, %151 : vector<1x128xf32>
    %179 = arith.mulf %163, %171 : vector<1x128xf32>
    %180 = arith.addf %178, %179 : vector<1x128xf32>
    %181 = math.tanh %180 : vector<1x128xf32>
    %182 = arith.mulf %177, %181 : vector<1x128xf32>
    %183 = vector.extract_strided_slice %5 {offsets = [6, 0], sizes = [1, 512], strides = [1, 1]} : vector<8x512xf32> to vector<1x512xf32>
    %184 = arith.truncf %182 : vector<1x128xf32> to vector<1x128xbf16>
    %cst_35 = arith.constant dense<0.000000e+00> : vector<1x512xf32>
    %185 = tpu.matmul %184, %6, %cst_35 {dimension_numbers = #tpu.dot_dimension_numbers<[1], [0], [0], [1], [0, 0, 1, 1], [], []>} : vector<1x128xbf16>, vector<128x512xbf16>, vector<1x512xf32> -> vector<1x512xf32>
    %186 = arith.addf %183, %185 : vector<1x512xf32>
    %187 = vector.extract_strided_slice %186 {offsets = [0, 0], sizes = [1, 128], strides = [1, 1]} : vector<1x512xf32> to vector<1x128xf32>
    %188 = arith.negf %187 : vector<1x128xf32>
    %189 = math.exp %188 : vector<1x128xf32>
    %cst_36 = arith.constant 1.000000e+00 : f32
    %190 = vector.broadcast %cst_36 : f32 to vector<1x128xf32>
    %191 = arith.addf %190, %189 : vector<1x128xf32>
    %192 = arith.divf %190, %191 : vector<1x128xf32>
    %193 = vector.extract_strided_slice %186 {offsets = [0, 128], sizes = [1, 128], strides = [1, 1]} : vector<1x512xf32> to vector<1x128xf32>
    %194 = arith.negf %193 : vector<1x128xf32>
    %195 = math.exp %194 : vector<1x128xf32>
    %cst_37 = arith.constant 1.000000e+00 : f32
    %196 = vector.broadcast %cst_37 : f32 to vector<1x128xf32>
    %197 = arith.addf %196, %195 : vector<1x128xf32>
    %198 = arith.divf %196, %197 : vector<1x128xf32>
    %199 = vector.extract_strided_slice %186 {offsets = [0, 256], sizes = [1, 128], strides = [1, 1]} : vector<1x512xf32> to vector<1x128xf32>
    %200 = math.tanh %199 : vector<1x128xf32>
    %201 = vector.extract_strided_slice %186 {offsets = [0, 384], sizes = [1, 128], strides = [1, 1]} : vector<1x512xf32> to vector<1x128xf32>
    %202 = arith.negf %201 : vector<1x128xf32>
    %203 = math.exp %202 : vector<1x128xf32>
    %cst_38 = arith.constant 1.000000e+00 : f32
    %204 = vector.broadcast %cst_38 : f32 to vector<1x128xf32>
    %205 = arith.addf %204, %203 : vector<1x128xf32>
    %206 = arith.divf %204, %205 : vector<1x128xf32>
    %207 = arith.mulf %198, %180 : vector<1x128xf32>
    %208 = arith.mulf %192, %200 : vector<1x128xf32>
    %209 = arith.addf %207, %208 : vector<1x128xf32>
    %210 = math.tanh %209 : vector<1x128xf32>
    %211 = arith.mulf %206, %210 : vector<1x128xf32>
    %212 = vector.extract_strided_slice %5 {offsets = [7, 0], sizes = [1, 512], strides = [1, 1]} : vector<8x512xf32> to vector<1x512xf32>
    %213 = arith.truncf %211 : vector<1x128xf32> to vector<1x128xbf16>
    %cst_39 = arith.constant dense<0.000000e+00> : vector<1x512xf32>
    %214 = tpu.matmul %213, %6, %cst_39 {dimension_numbers = #tpu.dot_dimension_numbers<[1], [0], [0], [1], [0, 0, 1, 1], [], []>} : vector<1x128xbf16>, vector<128x512xbf16>, vector<1x512xf32> -> vector<1x512xf32>
    %215 = arith.addf %212, %214 : vector<1x512xf32>
    %216 = vector.extract_strided_slice %215 {offsets = [0, 0], sizes = [1, 128], strides = [1, 1]} : vector<1x512xf32> to vector<1x128xf32>
    %217 = arith.negf %216 : vector<1x128xf32>
    %218 = math.exp %217 : vector<1x128xf32>
    %cst_40 = arith.constant 1.000000e+00 : f32
    %219 = vector.broadcast %cst_40 : f32 to vector<1x128xf32>
    %220 = arith.addf %219, %218 : vector<1x128xf32>
    %221 = arith.divf %219, %220 : vector<1x128xf32>
    %222 = vector.extract_strided_slice %215 {offsets = [0, 128], sizes = [1, 128], strides = [1, 1]} : vector<1x512xf32> to vector<1x128xf32>
    %223 = arith.negf %222 : vector<1x128xf32>
    %224 = math.exp %223 : vector<1x128xf32>
    %cst_41 = arith.constant 1.000000e+00 : f32
    %225 = vector.broadcast %cst_41 : f32 to vector<1x128xf32>
    %226 = arith.addf %225, %224 : vector<1x128xf32>
    %227 = arith.divf %225, %226 : vector<1x128xf32>
    %228 = vector.extract_strided_slice %215 {offsets = [0, 256], sizes = [1, 128], strides = [1, 1]} : vector<1x512xf32> to vector<1x128xf32>
    %229 = math.tanh %228 : vector<1x128xf32>
    %230 = vector.extract_strided_slice %215 {offsets = [0, 384], sizes = [1, 128], strides = [1, 1]} : vector<1x512xf32> to vector<1x128xf32>
    %231 = arith.negf %230 : vector<1x128xf32>
    %232 = math.exp %231 : vector<1x128xf32>
    %cst_42 = arith.constant 1.000000e+00 : f32
    %233 = vector.broadcast %cst_42 : f32 to vector<1x128xf32>
    %234 = arith.addf %233, %232 : vector<1x128xf32>
    %235 = arith.divf %233, %234 : vector<1x128xf32>
    %236 = arith.mulf %227, %209 : vector<1x128xf32>
    %237 = arith.mulf %221, %229 : vector<1x128xf32>
    %238 = arith.addf %236, %237 : vector<1x128xf32>
    %239 = math.tanh %238 : vector<1x128xf32>
    %240 = arith.mulf %235, %239 : vector<1x128xf32>
    %241 = arith.truncf %240 : vector<1x128xf32> to vector<1x128xbf16>
    %c0_43 = arith.constant 0 : index
    %c0_44 = arith.constant 0 : index
    %242 = vector.load %arg7[%c0_43, %c0_44] : memref<128x128xbf16, #tpu.memory_space<vmem>>, vector<128x128xbf16>
    %cst_45 = arith.constant dense<0.000000e+00> : vector<1x128xf32>
    %243 = tpu.matmul %241, %242, %cst_45 {dimension_numbers = #tpu.dot_dimension_numbers<[1], [0], [0], [1], [0, 0, 1, 1], [], []>} : vector<1x128xbf16>, vector<128x128xbf16>, vector<1x128xf32> -> vector<1x128xf32>
    %c0_46 = arith.constant 0 : index
    %c0_47 = arith.constant 0 : index
    %244 = vector.load %arg8[%c0_46, %c0_47] : memref<1x128xf32, #tpu.memory_space<vmem>>, vector<1x128xf32>
    %245 = arith.addf %243, %244 : vector<1x128xf32>
    %c0_48 = arith.constant 0 : index
    %c0_49 = arith.constant 0 : index
    %246 = vector.load %arg9[%c0_48, %c0_49] : memref<1x128xf32, #tpu.memory_space<vmem>>, vector<1x128xf32>
    tpu.vector_store %arg9[%c0_48, %c0_49], %245 {strides = array<i32>} : memref<1x128xf32, #tpu.memory_space<vmem>>, vector<1x128xf32>,
    return
  }
  func.func @transform_0(%arg0: i32) -> (i32, i32) {
    %c0_i32 = arith.constant 0 : i32
    %c0_i32_0 = arith.constant 0 : i32
    %c0_i32_1 = arith.constant 0 : i32
    return %c0_i32, %c0_i32_0 : i32, i32
  }
  func.func @transform_1(%arg0: i32) -> (i32, i32) {
    %c0_i32 = arith.constant 0 : i32
    %c0_i32_0 = arith.constant 0 : i32
    %c0_i32_1 = arith.constant 0 : i32
    return %c0_i32, %c0_i32_0 : i32, i32
  }
  func.func @transform_2(%arg0: i32) -> (i32, i32) {
    %c0_i32 = arith.constant 0 : i32
    %c0_i32_0 = arith.constant 0 : i32
    %c0_i32_1 = arith.constant 0 : i32
    return %c0_i32, %c0_i32_0 : i32, i32
  }
  func.func @transform_3(%arg0: i32) -> (i32, i32) {
    %c0_i32 = arith.constant 0 : i32
    %c0_i32_0 = arith.constant 0 : i32
    %c0_i32_1 = arith.constant 0 : i32
    return %c0_i32, %c0_i32_0 : i32, i32
  }
  func.func @transform_4(%arg0: i32) -> (i32, i32) {
    %c0_i32 = arith.constant 0 : i32
    %c0_i32_0 = arith.constant 0 : i32
    %c0_i32_1 = arith.constant 0 : i32
    return %c0_i32, %c0_i32_0 : i32, i32
  }
  func.func @transform_5(%arg0: i32) -> (i32, i32) {
    %c0_i32 = arith.constant 0 : i32
    %c0_i32_0 = arith.constant 0 : i32
    %c0_i32_1 = arith.constant 0 : i32
    return %c0_i32, %c0_i32_0 : i32, i32
  }
  func.func @transform_6(%arg0: i32) -> (i32, i32) {
    %c0_i32 = arith.constant 0 : i32
    %c0_i32_0 = arith.constant 0 : i32
    %c0_i32_1 = arith.constant 0 : i32
    return %c0_i32, %c0_i32_0 : i32, i32
  }
  func.func @transform_7(%arg0: i32) -> (i32, i32) {
    %c0_i32 = arith.constant 0 : i32
    %c0_i32_0 = arith.constant 0 : i32
    %c0_i32_1 = arith.constant 0 : i32
    return %c0_i32, %c0_i32_0 : i32, i32
  }
  func.func @transform_8(%arg0: i32) -> (i32, i32) {
    %c0_i32 = arith.constant 0 : i32
    %c0_i32_0 = arith.constant 0 : i32
    %c0_i32_1 = arith.constant 0 : i32
    return %c0_i32, %c0_i32_0 : i32, i32
  }
}

</mosaic_0001>

<llo_original>
// kernel: tpu_custom_call.1
$region0: #{tpu_custom_call.1}
  #allocation0 [shape = 'u32[]', space=smem, size = 0x4, offset = 0x4, fixed_abs, tag = 'smem constant byte address 0x4 - core index']
  #allocation1 [shape = 'u32[144,128]{1,0:T(1,128)}', space=vmem, size = 0x12000, scoped, tag = 'internal scratch']
  %s0 = inlined_call_operand.hbm [shape: bf16[8,128], index: 0, kind: input, shape index: {}]
  %s1 = inlined_call_operand.vmem [shape: f32[1,128], index: 1, kind: input, shape index: {}]
  %s2 = inlined_call_operand.vmem [shape: f32[1,128], index: 2, kind: input, shape index: {}]
  %s3 = inlined_call_operand.hbm [shape: bf16[128,512], index: 3, kind: input, shape index: {}]
  %s4 = inlined_call_operand.hbm [shape: bf16[128,512], index: 4, kind: input, shape index: {}]
  %s5 = inlined_call_operand.vmem [shape: f32[1,512], index: 5, kind: input, shape index: {}]
  %s6 = inlined_call_operand.hbm [shape: bf16[128,128], index: 6, kind: input, shape index: {}]
  %s7 = inlined_call_operand.vmem [shape: f32[1,128], index: 7, kind: input, shape index: {}]
  %s8 = inlined_call_operand.hbm [shape: f32[1,128], index: 8, kind: output, shape index: {}]
  %s9 = sld [smem:[#allocation0]]
  $region58: #{tpu_custom_call.1} parent=0
    _
  %s11 = ssub.s32 1, %s9
  %s12 = scalar_select 0, %s11, %s9
  $region1: #{tpu_custom_call.1} parent=0
    #allocation2 [shape = 'u8[2048]{0}', space=vmem, size = 0x800, scoped, tag = 'input window, operand 0, single buffered']
    #allocation3 [shape = 's32[1]{0}', space=sflag, size = 0x4, scoped, tag = 'scoped memory for tpu_custom_call.1']
    #allocation4 [shape = 's32[1]{0}', space=sflag, size = 0x4, scoped, tag = 'scoped memory for tpu_custom_call.1']
    #allocation5 [shape = 'u8[131072]{0}', space=vmem, size = 0x20000, scoped, tag = 'input window, operand 3, single buffered']
    #allocation6 [shape = 's32[1]{0}', space=sflag, size = 0x4, scoped, tag = 'scoped memory for tpu_custom_call.1']
    #allocation7 [shape = 'u8[131072]{0}', space=vmem, size = 0x20000, scoped, tag = 'input window, operand 4, single buffered']
    #allocation8 [shape = 'u8[32768]{0}', space=vmem, size = 0x8000, scoped, tag = 'input window, operand 6, single buffered']
    #allocation9 [shape = 's32[1]{0}', space=sflag, size = 0x4, scoped, tag = 'scoped memory for tpu_custom_call.1']
    #allocation10 [shape = 'u8[512]{0}', space=vmem, size = 0x400, scoped, tag = 'output window, operand 0, single buffered']
    %13 = vsyncpa [#allocation3], 0
    %14 = vsyncpa [#allocation6], 0
    %15 = vsyncpa [#allocation9], 0
    %16 = vsyncpa [#allocation4], 0
    // Predicated region
    $region2: #{tpu_custom_call.1} parent=1 // pred_check
      _
    $region3: #{tpu_custom_call.1} parent=1 // pred_check_branch
      %18 = sbr.rel (0) target = $region5
    $region4: #{tpu_custom_call.1} parent=1 // pred_region
      %s20 = ssub.s32 64, 64
      %21 = vsyncadd [#allocation3], %s20
      %s23 = sshll.u32 [#allocation2], 4
      %s24 = int_to_ptr.vmem [resolvable:$true] %s23
      %26 = dma.hbm_to_vmem [thread:$0]  %s0, 64, %s24, [#allocation3]
    $region5: #{tpu_custom_call.1} parent=1 // pred_fallthru
      _
    // Predicated region
    $region6: #{tpu_custom_call.1} parent=1 // pred_check
      _
    $region7: #{tpu_custom_call.1} parent=1 // pred_check_branch
      %28 = sbr.rel (0) target = $region9
    $region8: #{tpu_custom_call.1} parent=1 // pred_region
      _
    $region9: #{tpu_custom_call.1} parent=1 // pred_fallthru
      _
    // Predicated region
    $region10: #{tpu_custom_call.1} parent=1 // pred_check
      _
    $region11: #{tpu_custom_call.1} parent=1 // pred_check_branch
      %30 = sbr.rel (0) target = $region13
    $region12: #{tpu_custom_call.1} parent=1 // pred_region
      _
    $region13: #{tpu_custom_call.1} parent=1 // pred_fallthru
      _
    // Predicated region
    $region14: #{tpu_custom_call.1} parent=1 // pred_check
      _
    $region15: #{tpu_custom_call.1} parent=1 // pred_check_branch
      %32 = sbr.rel (0) target = $region17
    $region16: #{tpu_custom_call.1} parent=1 // pred_region
      %s34 = ssub.s32 4096, 4096
      %35 = vsyncadd [#allocation6], %s34
      %s36 = sshll.u32 [#allocation5], 4
      %s37 = int_to_ptr.vmem [resolvable:$true] %s36
      %42 = dma.hbm_to_vmem [thread:$0]  %s3, 4096, %s37, [#allocation6], 256, 256, 16
    $region17: #{tpu_custom_call.1} parent=1 // pred_fallthru
      _
    // Predicated region
    $region18: #{tpu_custom_call.1} parent=1 // pred_check
      _
    $region19: #{tpu_custom_call.1} parent=1 // pred_check_branch
      %44 = sbr.rel (0) target = $region21
    $region20: #{tpu_custom_call.1} parent=1 // pred_region
      %s46 = ssub.s32 4096, 4096
      %47 = vsyncadd [#allocation6], %s46
      %s48 = sshll.u32 [#allocation7], 4
      %s49 = int_to_ptr.vmem [resolvable:$true] %s48
      %54 = dma.hbm_to_vmem [thread:$0]  %s4, 4096, %s49, [#allocation6], 256, 256, 16
    $region21: #{tpu_custom_call.1} parent=1 // pred_fallthru
      _
    // Predicated region
    $region22: #{tpu_custom_call.1} parent=1 // pred_check
      _
    $region23: #{tpu_custom_call.1} parent=1 // pred_check_branch
      %56 = sbr.rel (0) target = $region25
    $region24: #{tpu_custom_call.1} parent=1 // pred_region
      _
    $region25: #{tpu_custom_call.1} parent=1 // pred_fallthru
      _
    // Predicated region
    $region26: #{tpu_custom_call.1} parent=1 // pred_check
      _
    $region27: #{tpu_custom_call.1} parent=1 // pred_check_branch
      %58 = sbr.rel (0) target = $region29
    $region28: #{tpu_custom_call.1} parent=1 // pred_region
      %s60 = ssub.s32 1024, 1024
      %61 = vsyncadd [#allocation9], %s60
      %s62 = sshll.u32 [#allocation8], 4
      %s63 = int_to_ptr.vmem [resolvable:$true] %s62
      %68 = dma.hbm_to_vmem [thread:$0]  %s6, 1024, %s63, [#allocation9], 64, 64, 4
    $region29: #{tpu_custom_call.1} parent=1 // pred_fallthru
      _
    // Predicated region
    $region30: #{tpu_custom_call.1} parent=1 // pred_check
      _
    $region31: #{tpu_custom_call.1} parent=1 // pred_check_branch
      %70 = sbr.rel (0) target = $region33
    $region32: #{tpu_custom_call.1} parent=1 // pred_region
      _
    $region33: #{tpu_custom_call.1} parent=1 // pred_fallthru
      _
    // Predicated region
    $region34: #{tpu_custom_call.1} parent=1 // pred_check
      _
    $region35: #{tpu_custom_call.1} parent=1 // pred_check_branch
      %72 = sbr.rel (0) target = $region37
    $region36: #{tpu_custom_call.1} parent=1 // pred_region
      %73 = dma.done [#allocation3], 64
    $region37: #{tpu_custom_call.1} parent=1 // pred_fallthru
      _
    // Predicated region
    $region38: #{tpu_custom_call.1} parent=1 // pred_check
      _
    $region39: #{tpu_custom_call.1} parent=1 // pred_check_branch
      %75 = sbr.rel (0) target = $region41
    $region40: #{tpu_custom_call.1} parent=1 // pred_region
      %76 = dma.done [#allocation6], 4096
    $region41: #{tpu_custom_call.1} parent=1 // pred_fallthru
      _
    // Predicated region
    $region42: #{tpu_custom_call.1} parent=1 // pred_check
      _
    $region43: #{tpu_custom_call.1} parent=1 // pred_check_branch
      %78 = sbr.rel (0) target = $region45
    $region44: #{tpu_custom_call.1} parent=1 // pred_region
      %79 = dma.done [#allocation6], 4096
    $region45: #{tpu_custom_call.1} parent=1 // pred_fallthru
      _
    // Predicated region
    $region46: #{tpu_custom_call.1} parent=1 // pred_check
      _
    $region47: #{tpu_custom_call.1} parent=1 // pred_check_branch
      %81 = sbr.rel (0) target = $region49
    $region48: #{tpu_custom_call.1} parent=1 // pred_region
      %82 = dma.done [#allocation9], 1024
    $region49: #{tpu_custom_call.1} parent=1 // pred_fallthru
      _
    %v84 = vld [vmem:[#allocation2] sm:$0xf]
    %v85 = vld [vmem:[#allocation5] sm:$0xff]
    %v86 = vld [vmem:[#allocation5 + $0x8] sm:$0xff]
    %v87 = vld [vmem:[#allocation5 + $0x10] sm:$0xff]
    %v88 = vld [vmem:[#allocation5 + $0x18] sm:$0xff]
    %v89 = vld [vmem:[#allocation5 + $0x20] sm:$0xff]
    %v90 = vld [vmem:[#allocation5 + $0x28] sm:$0xff]
    %v91 = vld [vmem:[#allocation5 + $0x30] sm:$0xff]
    %v92 = vld [vmem:[#allocation5 + $0x38] sm:$0xff]
    %v93 = vld [vmem:[#allocation5 + $0x40] sm:$0xff]
    %v94 = vld [vmem:[#allocation5 + $0x48] sm:$0xff]
    %v95 = vld [vmem:[#allocation5 + $0x50] sm:$0xff]
    %v96 = vld [vmem:[#allocation5 + $0x58] sm:$0xff]
    %v97 = vld [vmem:[#allocation5 + $0x60] sm:$0xff]
    %v98 = vld [vmem:[#allocation5 + $0x68] sm:$0xff]
    %v99 = vld [vmem:[#allocation5 + $0x70] sm:$0xff]
    %v100 = vld [vmem:[#allocation5 + $0x78] sm:$0xff]
    %v101 = vld [vmem:[#allocation5 + $0x80] sm:$0xff]
    %v102 = vld [vmem:[#allocation5 + $0x88] sm:$0xff]
    %v103 = vld [vmem:[#allocation5 + $0x90] sm:$0xff]
    %v104 = vld [vmem:[#allocation5 + $0x98] sm:$0xff]
    %v105 = vld [vmem:[#allocation5 + $0xa0] sm:$0xff]
    %v106 = vld [vmem:[#allocation5 + $0xa8] sm:$0xff]
    %v107 = vld [vmem:[#allocation5 + $0xb0] sm:$0xff]
    %v108 = vld [vmem:[#allocation5 + $0xb8] sm:$0xff]
    %v109 = vld [vmem:[#allocation5 + $0xc0] sm:$0xff]
    %v110 = vld [vmem:[#allocation5 + $0xc8] sm:$0xff]
    %v111 = vld [vmem:[#allocation5 + $0xd0] sm:$0xff]
    %v112 = vld [vmem:[#allocation5 + $0xd8] sm:$0xff]
    %v113 = vld [vmem:[#allocation5 + $0xe0] sm:$0xff]
    %v114 = vld [vmem:[#allocation5 + $0xe8] sm:$0xff]
    %v115 = vld [vmem:[#allocation5 + $0xf0] sm:$0xff]
    %v116 = vld [vmem:[#allocation5 + $0xf8] sm:$0xff]
    %v117 = vld [vmem:[%s5] sm:$0xf]
    %v119 = vlaneseq
    %v120 = vshrl.u32 %v119, 7
    %v121 = vsub.s32 0, %v120
    %v122 = vrot.slane %v117, %v121
    %v123 = vlaneseq
    %v124 = vshrl.u32 %v123, 7
    %v125 = vsub.s32 1, %v124
    %v126 = vrot.slane %v117, %v125
    %v127 = vlaneseq
    %v128 = vshrl.u32 %v127, 7
    %v129 = vsub.s32 2, %v128
    %v130 = vrot.slane %v117, %v129
    %v131 = vlaneseq
    %v132 = vshrl.u32 %v131, 7
    %v133 = vsub.s32 3, %v132
    %v134 = vrot.slane %v117, %v133
    %v171 = vunpack.c.l.b16 %v85
    %v172 = vunpack.c.h.b16 %v85
    %v173 = vunpack.c.l.b16 %v86
    %v174 = vunpack.c.h.b16 %v86
    %v175 = vunpack.c.l.b16 %v87
    %v176 = vunpack.c.h.b16 %v87
    %v177 = vunpack.c.l.b16 %v88
    %v178 = vunpack.c.h.b16 %v88
    %v179 = vunpack.c.l.b16 %v89
    %v180 = vunpack.c.h.b16 %v89
    %v181 = vunpack.c.l.b16 %v90
    %v182 = vunpack.c.h.b16 %v90
    %v183 = vunpack.c.l.b16 %v91
    %v184 = vunpack.c.h.b16 %v91
    %v185 = vunpack.c.l.b16 %v92
    %v186 = vunpack.c.h.b16 %v92
    %v187 = vunpack.c.l.b16 %v93
    %v188 = vunpack.c.h.b16 %v93
    %v189 = vunpack.c.l.b16 %v94
    %v190 = vunpack.c.h.b16 %v94
    %v191 = vunpack.c.l.b16 %v95
    %v192 = vunpack.c.h.b16 %v95
    %v193 = vunpack.c.l.b16 %v96
    %v194 = vunpack.c.h.b16 %v96
    %v195 = vunpack.c.l.b16 %v97
    %v196 = vunpack.c.h.b16 %v97
    %v197 = vunpack.c.l.b16 %v98
    %v198 = vunpack.c.h.b16 %v98
    %v199 = vunpack.c.l.b16 %v99
    %v200 = vunpack.c.h.b16 %v99
    %v201 = vunpack.c.l.b16 %v100
    %v202 = vunpack.c.h.b16 %v100
    %v203 = vunpack.c.l.b16 %v101
    %v204 = vunpack.c.h.b16 %v101
    %v205 = vunpack.c.l.b16 %v102
    %v206 = vunpack.c.h.b16 %v102
    %v207 = vunpack.c.l.b16 %v103
    %v208 = vunpack.c.h.b16 %v103
    %v209 = vunpack.c.l.b16 %v104
    %v210 = vunpack.c.h.b16 %v104
    %v211 = vunpack.c.l.b16 %v105
    %v212 = vunpack.c.h.b16 %v105
    %v213 = vunpack.c.l.b16 %v106
    %v214 = vunpack.c.h.b16 %v106
    %v215 = vunpack.c.l.b16 %v107
    %v216 = vunpack.c.h.b16 %v107
    %v217 = vunpack.c.l.b16 %v108
    %v218 = vunpack.c.h.b16 %v108
    %v219 = vunpack.c.l.b16 %v109
    %v220 = vunpack.c.h.b16 %v109
    %v221 = vunpack.c.l.b16 %v110
    %v222 = vunpack.c.h.b16 %v110
    %v223 = vunpack.c.l.b16 %v111
    %v224 = vunpack.c.h.b16 %v111
    %v225 = vunpack.c.l.b16 %v112
    %v226 = vunpack.c.h.b16 %v112
    %v227 = vunpack.c.l.b16 %v113
    %v228 = vunpack.c.h.b16 %v113
    %v229 = vunpack.c.l.b16 %v114
    %v230 = vunpack.c.h.b16 %v114
    %v231 = vunpack.c.l.b16 %v115
    %v232 = vunpack.c.h.b16 %v115
    %v233 = vunpack.c.l.b16 %v116
    %v234 = vunpack.c.h.b16 %v116
    %v235 = vpack.c.b16 %v175, %v171
    %v236 = vpack.c.b16 %v176, %v172
    %v237 = vpack.c.b16 %v177, %v173
    %v238 = vpack.c.b16 %v178, %v174
    %v239 = vpack.c.b16 %v183, %v179
    %v240 = vpack.c.b16 %v184, %v180
    %v241 = vpack.c.b16 %v185, %v181
    %v242 = vpack.c.b16 %v186, %v182
    %v243 = vpack.c.b16 %v191, %v187
    %v244 = vpack.c.b16 %v192, %v188
    %v245 = vpack.c.b16 %v193, %v189
    %v246 = vpack.c.b16 %v194, %v190
    %v247 = vpack.c.b16 %v199, %v195
    %v248 = vpack.c.b16 %v200, %v196
    %v249 = vpack.c.b16 %v201, %v197
    %v250 = vpack.c.b16 %v202, %v198
    %v251 = vpack.c.b16 %v207, %v203
    %v252 = vpack.c.b16 %v208, %v204
    %v253 = vpack.c.b16 %v209, %v205
    %v254 = vpack.c.b16 %v210, %v206
    %v255 = vpack.c.b16 %v215, %v211
    %v256 = vpack.c.b16 %v216, %v212
    %v257 = vpack.c.b16 %v217, %v213
    %v258 = vpack.c.b16 %v218, %v214
    %v259 = vpack.c.b16 %v223, %v219
    %v260 = vpack.c.b16 %v224, %v220
    %v261 = vpack.c.b16 %v225, %v221
    %v262 = vpack.c.b16 %v226, %v222
    %v263 = vpack.c.b16 %v231, %v227
    %v264 = vpack.c.b16 %v232, %v228
    %v265 = vpack.c.b16 %v233, %v229
    %v266 = vpack.c.b16 %v234, %v230
    %299 = vmatprep.subr.bf16.mxu0 %v264
    %300 = vmatpush1.bf16.msra.mxu0 %v263
    %301 = vmatprep.subr.bf16.mxu0 %v260
    %302 = vmatpush1.bf16.msra.mxu0 %v259
    %303 = vmatprep.subr.bf16.mxu0 %v256
    %304 = vmatpush1.bf16.msra.mxu0 %v255
    %305 = vmatprep.subr.bf16.mxu0 %v252
    %306 = vmatpush1.bf16.msra.mxu0 %v251
    %307 = vmatprep.subr.bf16.mxu0 %v248
    %308 = vmatpush1.bf16.msra.mxu0 %v247
    %309 = vmatprep.subr.bf16.mxu0 %v244
    %310 = vmatpush1.bf16.msra.mxu0 %v243
    %311 = vmatprep.subr.bf16.mxu0 %v240
    %312 = vmatpush1.bf16.msra.mxu0 %v239
    %313 = vmatprep.subr.bf16.mxu0 %v236
    %314 = vmatpush1.bf16.msra.mxu0 %v235
    %315 = vmatprep.subr.bf16.mxu0 0
    %316 = vmatpush2.bf16.msra.mxu0 0
    %317 = vmatprep.subr.bf16.mxu0 0
    %318 = vmatpush2.bf16.msra.mxu0 0
    %319 = vmatprep.subr.bf16.mxu0 0
    %320 = vmatpush2.bf16.msra.mxu0 0
    %321 = vmatprep.subr.bf16.mxu0 0
    %322 = vmatpush2.bf16.msra.mxu0 0
    %323 = vmatprep.subr.bf16.mxu0 0
    %324 = vmatpush2.bf16.msra.mxu0 0
    %325 = vmatprep.subr.bf16.mxu0 0
    %326 = vmatpush2.bf16.msra.mxu0 0
    %327 = vmatprep.subr.bf16.mxu0 0
    %328 = vmatpush2.bf16.msra.mxu0 0
    %329 = vmatprep.subr.bf16.mxu0 0
    %330 = vmatpush2.bf16.msra.mxu0 0
    %331 = vmatprep.mubr.bf16.mxu0 0
    %332 = vmatmul.mubr.bf16.gmra.mxu0 %v84
    %v333 = vpop.f32.mrf.mxu0
    %v334 = vadd.f32 %v122, %v333
    %v335 = vpop.f32.mrf.mxu0
    %v336 = vadd.f32 %v126, %v335
    %v337 = vpop.f32.mrf.mxu0
    %v338 = vpop.f32.mrf.mxu0
    %339 = vdwg.mxu0
    %340 = vmatprep.subr.bf16.mxu0 %v266
    %341 = vmatpush1.bf16.msra.mxu0 %v265
    %342 = vmatprep.subr.bf16.mxu0 %v262
    %343 = vmatpush1.bf16.msra.mxu0 %v261
    %344 = vmatprep.subr.bf16.mxu0 %v258
    %345 = vmatpush1.bf16.msra.mxu0 %v257
    %346 = vmatprep.subr.bf16.mxu0 %v254
    %347 = vmatpush1.bf16.msra.mxu0 %v253
    %348 = vmatprep.subr.bf16.mxu0 %v250
    %349 = vmatpush1.bf16.msra.mxu0 %v249
    %350 = vmatprep.subr.bf16.mxu0 %v246
    %351 = vmatpush1.bf16.msra.mxu0 %v245
    %352 = vmatprep.subr.bf16.mxu0 %v242
    %353 = vmatpush1.bf16.msra.mxu0 %v241
    %354 = vmatprep.subr.bf16.mxu0 %v238
    %355 = vmatpush1.bf16.msra.mxu0 %v237
    %356 = vmatprep.subr.bf16.mxu0 0
    %357 = vmatpush2.bf16.msra.mxu0 0
    %358 = vmatprep.subr.bf16.mxu0 0
    %359 = vmatpush2.bf16.msra.mxu0 0
    %360 = vmatprep.subr.bf16.mxu0 0
    %361 = vmatpush2.bf16.msra.mxu0 0
    %362 = vmatprep.subr.bf16.mxu0 0
    %363 = vmatpush2.bf16.msra.mxu0 0
    %364 = vmatprep.subr.bf16.mxu0 0
    %365 = vmatpush2.bf16.msra.mxu0 0
    %366 = vmatprep.subr.bf16.mxu0 0
    %367 = vmatpush2.bf16.msra.mxu0 0
    %368 = vmatprep.subr.bf16.mxu0 0
    %369 = vmatpush2.bf16.msra.mxu0 0
    %370 = vmatprep.subr.bf16.mxu0 0
    %371 = vmatpush2.bf16.msra.mxu0 0
    %372 = vmatprep.mubr.bf16.mxu0 0
    %373 = vmatmul.mubr.bf16.gmra.mxu0 %v84
    %v374 = vpop.f32.mrf.mxu0
    %v375 = vadd.f32 %v130, %v374
    %v376 = vpop.f32.mrf.mxu0
    %v377 = vadd.f32 %v134, %v376
    %v378 = vpop.f32.mrf.mxu0
    %v379 = vpop.f32.mrf.mxu0
    %380 = vdwg.mxu0
    %v381 = vld [vmem:[#allocation7] sm:$0xff]
    %v382 = vld [vmem:[#allocation7 + $0x8] sm:$0xff]
    %v383 = vld [vmem:[#allocation7 + $0x10] sm:$0xff]
    %v384 = vld [vmem:[#allocation7 + $0x18] sm:$0xff]
    %v385 = vld [vmem:[#allocation7 + $0x20] sm:$0xff]
    %v386 = vld [vmem:[#allocation7 + $0x28] sm:$0xff]
    %v387 = vld [vmem:[#allocation7 + $0x30] sm:$0xff]
    %v388 = vld [vmem:[#allocation7 + $0x38] sm:$0xff]
    %v389 = vld [vmem:[#allocation7 + $0x40] sm:$0xff]
    %v390 = vld [vmem:[#allocation7 + $0x48] sm:$0xff]
    %v391 = vld [vmem:[#allocation7 + $0x50] sm:$0xff]
    %v392 = vld [vmem:[#allocation7 + $0x58] sm:$0xff]
    %v393 = vld [vmem:[#allocation7 + $0x60] sm:$0xff]
    %v394 = vld [vmem:[#allocation7 + $0x68] sm:$0xff]
    %v395 = vld [vmem:[#allocation7 + $0x70] sm:$0xff]
    %v396 = vld [vmem:[#allocation7 + $0x78] sm:$0xff]
    %v397 = vld [vmem:[#allocation7 + $0x80] sm:$0xff]
    %v398 = vld [vmem:[#allocation7 + $0x88] sm:$0xff]
    %v399 = vld [vmem:[#allocation7 + $0x90] sm:$0xff]
    %v400 = vld [vmem:[#allocation7 + $0x98] sm:$0xff]
    %v401 = vld [vmem:[#allocation7 + $0xa0] sm:$0xff]
    %v402 = vld [vmem:[#allocation7 + $0xa8] sm:$0xff]
    %v403 = vld [vmem:[#allocation7 + $0xb0] sm:$0xff]
    %v404 = vld [vmem:[#allocation7 + $0xb8] sm:$0xff]
    %v405 = vld [vmem:[#allocation7 + $0xc0] sm:$0xff]
    %v406 = vld [vmem:[#allocation7 + $0xc8] sm:$0xff]
    %v407 = vld [vmem:[#allocation7 + $0xd0] sm:$0xff]
    %v408 = vld [vmem:[#allocation7 + $0xd8] sm:$0xff]
    %v409 = vld [vmem:[#allocation7 + $0xe0] sm:$0xff]
    %v410 = vld [vmem:[#allocation7 + $0xe8] sm:$0xff]
    %v411 = vld [vmem:[#allocation7 + $0xf0] sm:$0xff]
    %v412 = vld [vmem:[#allocation7 + $0xf8] sm:$0xff]
    %v413 = vld [vmem:[%s1] sm:$0x1]
    %v414 = vld [vmem:[%s2] sm:$0x1]
    %v415 = vpack.c.bf16 %v413, %v413
    %v448 = vunpack.c.l.b16 %v381
    %v449 = vunpack.c.h.b16 %v381
    %v450 = vunpack.c.l.b16 %v382
    %v451 = vunpack.c.h.b16 %v382
    %v452 = vunpack.c.l.b16 %v383
    %v453 = vunpack.c.h.b16 %v383
    %v454 = vunpack.c.l.b16 %v384
    %v455 = vunpack.c.h.b16 %v384
    %v456 = vunpack.c.l.b16 %v385
    %v457 = vunpack.c.h.b16 %v385
    %v458 = vunpack.c.l.b16 %v386
    %v459 = vunpack.c.h.b16 %v386
    %v460 = vunpack.c.l.b16 %v387
    %v461 = vunpack.c.h.b16 %v387
    %v462 = vunpack.c.l.b16 %v388
    %v463 = vunpack.c.h.b16 %v388
    %v464 = vunpack.c.l.b16 %v389
    %v465 = vunpack.c.h.b16 %v389
    %v466 = vunpack.c.l.b16 %v390
    %v467 = vunpack.c.h.b16 %v390
    %v468 = vunpack.c.l.b16 %v391
    %v469 = vunpack.c.h.b16 %v391
    %v470 = vunpack.c.l.b16 %v392
    %v471 = vunpack.c.h.b16 %v392
    %v472 = vunpack.c.l.b16 %v393
    %v473 = vunpack.c.h.b16 %v393
    %v474 = vunpack.c.l.b16 %v394
    %v475 = vunpack.c.h.b16 %v394
    %v476 = vunpack.c.l.b16 %v395
    %v477 = vunpack.c.h.b16 %v395
    %v478 = vunpack.c.l.b16 %v396
    %v479 = vunpack.c.h.b16 %v396
    %v480 = vunpack.c.l.b16 %v397
    %v481 = vunpack.c.h.b16 %v397
    %v482 = vunpack.c.l.b16 %v398
    %v483 = vunpack.c.h.b16 %v398
    %v484 = vunpack.c.l.b16 %v399
    %v485 = vunpack.c.h.b16 %v399
    %v486 = vunpack.c.l.b16 %v400
    %v487 = vunpack.c.h.b16 %v400
    %v488 = vunpack.c.l.b16 %v401
    %v489 = vunpack.c.h.b16 %v401
    %v490 = vunpack.c.l.b16 %v402
    %v491 = vunpack.c.h.b16 %v402
    %v492 = vunpack.c.l.b16 %v403
    %v493 = vunpack.c.h.b16 %v403
    %v494 = vunpack.c.l.b16 %v404
    %v495 = vunpack.c.h.b16 %v404
    %v496 = vunpack.c.l.b16 %v405
    %v497 = vunpack.c.h.b16 %v405
    %v498 = vunpack.c.l.b16 %v406
    %v499 = vunpack.c.h.b16 %v406
    %v500 = vunpack.c.l.b16 %v407
    %v501 = vunpack.c.h.b16 %v407
    %v502 = vunpack.c.l.b16 %v408
    %v503 = vunpack.c.h.b16 %v408
    %v504 = vunpack.c.l.b16 %v409
    %v505 = vunpack.c.h.b16 %v409
    %v506 = vunpack.c.l.b16 %v410
    %v507 = vunpack.c.h.b16 %v410
    %v508 = vunpack.c.l.b16 %v411
    %v509 = vunpack.c.h.b16 %v411
    %v510 = vunpack.c.l.b16 %v412
    %v511 = vunpack.c.h.b16 %v412
    %v512 = vpack.c.b16 %v452, %v448
    %v513 = vpack.c.b16 %v453, %v449
    %v514 = vpack.c.b16 %v454, %v450
    %v515 = vpack.c.b16 %v455, %v451
    %v516 = vpack.c.b16 %v460, %v456
    %v517 = vpack.c.b16 %v461, %v457
    %v518 = vpack.c.b16 %v462, %v458
    %v519 = vpack.c.b16 %v463, %v459
    %v520 = vpack.c.b16 %v468, %v464
    %v521 = vpack.c.b16 %v469, %v465
    %v522 = vpack.c.b16 %v470, %v466
    %v523 = vpack.c.b16 %v471, %v467
    %v524 = vpack.c.b16 %v476, %v472
    %v525 = vpack.c.b16 %v477, %v473
    %v526 = vpack.c.b16 %v478, %v474
    %v527 = vpack.c.b16 %v479, %v475
    %v528 = vpack.c.b16 %v484, %v480
    %v529 = vpack.c.b16 %v485, %v481
    %v530 = vpack.c.b16 %v486, %v482
    %v531 = vpack.c.b16 %v487, %v483
    %v532 = vpack.c.b16 %v492, %v488
    %v533 = vpack.c.b16 %v493, %v489
    %v534 = vpack.c.b16 %v494, %v490
    %v535 = vpack.c.b16 %v495, %v491
    %v536 = vpack.c.b16 %v500, %v496
    %v537 = vpack.c.b16 %v501, %v497
    %v538 = vpack.c.b16 %v502, %v498
    %v539 = vpack.c.b16 %v503, %v499
    %v540 = vpack.c.b16 %v508, %v504
    %v541 = vpack.c.b16 %v509, %v505
    %v542 = vpack.c.b16 %v510, %v506
    %v543 = vpack.c.b16 %v511, %v507
    %576 = vmatprep.subr.bf16.mxu0 %v541
    %577 = vmatpush1.bf16.msra.mxu0 %v540
    %578 = vmatprep.subr.bf16.mxu0 %v537
    %579 = vmatpush1.bf16.msra.mxu0 %v536
    %580 = vmatprep.subr.bf16.mxu0 %v533
    %581 = vmatpush1.bf16.msra.mxu0 %v532
    %582 = vmatprep.subr.bf16.mxu0 %v529
    %583 = vmatpush1.bf16.msra.mxu0 %v528
    %584 = vmatprep.subr.bf16.mxu0 %v525
    %585 = vmatpush1.bf16.msra.mxu0 %v524
    %586 = vmatprep.subr.bf16.mxu0 %v521
    %587 = vmatpush1.bf16.msra.mxu0 %v520
    %588 = vmatprep.subr.bf16.mxu0 %v517
    %589 = vmatpush1.bf16.msra.mxu0 %v516
    %590 = vmatprep.subr.bf16.mxu0 %v513
    %591 = vmatpush1.bf16.msra.mxu0 %v512
    %592 = vmatprep.subr.bf16.mxu0 0
    %593 = vmatpush2.bf16.msra.mxu0 0
    %594 = vmatprep.subr.bf16.mxu0 0
    %595 = vmatpush2.bf16.msra.mxu0 0
    %596 = vmatprep.subr.bf16.mxu0 0
    %597 = vmatpush2.bf16.msra.mxu0 0
    %598 = vmatprep.subr.bf16.mxu0 0
    %599 = vmatpush2.bf16.msra.mxu0 0
    %600 = vmatprep.subr.bf16.mxu0 0
    %601 = vmatpush2.bf16.msra.mxu0 0
    %602 = vmatprep.subr.bf16.mxu0 0
    %603 = vmatpush2.bf16.msra.mxu0 0
    %604 = vmatprep.subr.bf16.mxu0 0
    %605 = vmatpush2.bf16.msra.mxu0 0
    %606 = vmatprep.subr.bf16.mxu0 0
    %607 = vmatpush2.bf16.msra.mxu0 0
    %608 = vmatprep.mubr.bf16.mxu0 0
    %609 = vmatmul.mubr.bf16.gmra.mxu0 %v415
    %v610 = vpop.f32.mrf.mxu0
    %v611 = vadd.f32 0.0, %v610
    %v612 = vpop.f32.mrf.mxu0
    %v613 = vadd.f32 0.0, %v612
    %v614 = vpop.f32.mrf.mxu0
    %v615 = vpop.f32.mrf.mxu0
    %616 = vdwg.mxu0
    %617 = vmatprep.subr.bf16.mxu0 %v543
    %618 = vmatpush1.bf16.msra.mxu0 %v542
    %619 = vmatprep.subr.bf16.mxu0 %v539
    %620 = vmatpush1.bf16.msra.mxu0 %v538
    %621 = vmatprep.subr.bf16.mxu0 %v535
    %622 = vmatpush1.bf16.msra.mxu0 %v534
    %623 = vmatprep.subr.bf16.mxu0 %v531
    %624 = vmatpush1.bf16.msra.mxu0 %v530
    %625 = vmatprep.subr.bf16.mxu0 %v527
    %626 = vmatpush1.bf16.msra.mxu0 %v526
    %627 = vmatprep.subr.bf16.mxu0 %v523
    %628 = vmatpush1.bf16.msra.mxu0 %v522
    %629 = vmatprep.subr.bf16.mxu0 %v519
    %630 = vmatpush1.bf16.msra.mxu0 %v518
    %631 = vmatprep.subr.bf16.mxu0 %v515
    %632 = vmatpush1.bf16.msra.mxu0 %v514
    %633 = vmatprep.subr.bf16.mxu0 0
    %634 = vmatpush2.bf16.msra.mxu0 0
    %635 = vmatprep.subr.bf16.mxu0 0
    %636 = vmatpush2.bf16.msra.mxu0 0
    %637 = vmatprep.subr.bf16.mxu0 0
    %638 = vmatpush2.bf16.msra.mxu0 0
    %639 = vmatprep.subr.bf16.mxu0 0
    %640 = vmatpush2.bf16.msra.mxu0 0
    %641 = vmatprep.subr.bf16.mxu0 0
    %642 = vmatpush2.bf16.msra.mxu0 0
    %643 = vmatprep.subr.bf16.mxu0 0
    %644 = vmatpush2.bf16.msra.mxu0 0
    %645 = vmatprep.subr.bf16.mxu0 0
    %646 = vmatpush2.bf16.msra.mxu0 0
    %647 = vmatprep.subr.bf16.mxu0 0
    %648 = vmatpush2.bf16.msra.mxu0 0
    %649 = vmatprep.mubr.bf16.mxu0 0
    %650 = vmatmul.mubr.bf16.gmra.mxu0 %v415
    %v651 = vpop.f32.mrf.mxu0
    %v652 = vadd.f32 0.0, %v651
    %v653 = vpop.f32.mrf.mxu0
    %v654 = vadd.f32 0.0, %v653
    %v655 = vpop.f32.mrf.mxu0
    %v656 = vpop.f32.mrf.mxu0
    %657 = vdwg.mxu0
    %v658 = vadd.f32 %v334, %v611
    %v659 = vadd.f32 %v336, %v613
    %v660 = vadd.f32 %v375, %v652
    %v661 = vadd.f32 %v377, %v654
    %v662 = vxor.u32 %v658, 2147483648
    %v663 = vmul.f32 %v662, 1.442695
    %v664 = vpow.pop %v663
    %v665 = vadd.f32 %v664, 1.0
    %v666 = vrcp.pop %v665
    %v667 = vmul.f32 1.0, %v666
    %v668 = vxor.u32 %v659, 2147483648
    %v669 = vmul.f32 %v668, 1.442695
    %v670 = vpow.pop %v669
    %v671 = vadd.f32 %v670, 1.0
    %v672 = vrcp.pop %v671
    %v673 = vmul.f32 1.0, %v672
    %v674 = vtanh.pop %v660
    %v675 = vxor.u32 %v661, 2147483648
    %v676 = vmul.f32 %v675, 1.442695
    %v677 = vpow.pop %v676
    %v678 = vadd.f32 %v677, 1.0
    %v679 = vrcp.pop %v678
    %v680 = vmul.f32 1.0, %v679
    %v681 = vmul.f32 %v673, %v414
    %v682 = vmul.f32 %v667, %v674
    %v683 = vadd.f32 %v681, %v682
    %v684 = vtanh.pop %v683
    %v685 = vmul.f32 %v680, %v684
    %v686 = vpack.c.bf16 %v685, %v685
    %687 = vmatprep.subr.bf16.mxu0 %v541
    %688 = vmatpush1.bf16.msra.mxu0 %v540
    %689 = vmatprep.subr.bf16.mxu0 %v537
    %690 = vmatpush1.bf16.msra.mxu0 %v536
    %691 = vmatprep.subr.bf16.mxu0 %v533
    %692 = vmatpush1.bf16.msra.mxu0 %v532
    %693 = vmatprep.subr.bf16.mxu0 %v529
    %694 = vmatpush1.bf16.msra.mxu0 %v528
    %695 = vmatprep.subr.bf16.mxu0 %v525
    %696 = vmatpush1.bf16.msra.mxu0 %v524
    %697 = vmatprep.subr.bf16.mxu0 %v521
    %698 = vmatpush1.bf16.msra.mxu0 %v520
    %699 = vmatprep.subr.bf16.mxu0 %v517
    %700 = vmatpush1.bf16.msra.mxu0 %v516
    %701 = vmatprep.subr.bf16.mxu0 %v513
    %702 = vmatpush1.bf16.msra.mxu0 %v512
    %703 = vmatprep.subr.bf16.mxu0 0
    %704 = vmatpush2.bf16.msra.mxu0 0
    %705 = vmatprep.subr.bf16.mxu0 0
    %706 = vmatpush2.bf16.msra.mxu0 0
    %707 = vmatprep.subr.bf16.mxu0 0
    %708 = vmatpush2.bf16.msra.mxu0 0
    %709 = vmatprep.subr.bf16.mxu0 0
    %710 = vmatpush2.bf16.msra.mxu0 0
    %711 = vmatprep.subr.bf16.mxu0 0
    %712 = vmatpush2.bf16.msra.mxu0 0
    %713 = vmatprep.subr.bf16.mxu0 0
    %714 = vmatpush2.bf16.msra.mxu0 0
    %715 = vmatprep.subr.bf16.mxu0 0
    %716 = vmatpush2.bf16.msra.mxu0 0
    %717 = vmatprep.subr.bf16.mxu0 0
    %718 = vmatpush2.bf16.msra.mxu0 0
    %719 = vmatprep.mubr.bf16.mxu0 0
    %720 = vmatmul.mubr.bf16.gmra.mxu0 %v686
    %v721 = vpop.f32.mrf.mxu0
    %v722 = vadd.f32 0.0, %v721
    %v723 = vpop.f32.mrf.mxu0
    %v724 = vadd.f32 0.0, %v723
    %v725 = vpop.f32.mrf.mxu0
    %v726 = vpop.f32.mrf.mxu0
    %727 = vdwg.mxu0
    %728 = vmatprep.subr.bf16.mxu0 %v543
    %729 = vmatpush1.bf16.msra.mxu0 %v542
    %730 = vmatprep.subr.bf16.mxu0 %v539
    %731 = vmatpush1.bf16.msra.mxu0 %v538
    %732 = vmatprep.subr.bf16.mxu0 %v535
    %733 = vmatpush1.bf16.msra.mxu0 %v534
    %734 = vmatprep.subr.bf16.mxu0 %v531
    %735 = vmatpush1.bf16.msra.mxu0 %v530
    %736 = vmatprep.subr.bf16.mxu0 %v527
    %737 = vmatpush1.bf16.msra.mxu0 %v526
    %738 = vmatprep.subr.bf16.mxu0 %v523
    %739 = vmatpush1.bf16.msra.mxu0 %v522
    %740 = vmatprep.subr.bf16.mxu0 %v519
    %741 = vmatpush1.bf16.msra.mxu0 %v518
    %742 = vmatprep.subr.bf16.mxu0 %v515
    %743 = vmatpush1.bf16.msra.mxu0 %v514
    %744 = vmatprep.subr.bf16.mxu0 0
    %745 = vmatpush2.bf16.msra.mxu0 0
    %746 = vmatprep.subr.bf16.mxu0 0
    %747 = vmatpush2.bf16.msra.mxu0 0
    %748 = vmatprep.subr.bf16.mxu0 0
    %749 = vmatpush2.bf16.msra.mxu0 0
    %750 = vmatprep.subr.bf16.mxu0 0
    %751 = vmatpush2.bf16.msra.mxu0 0
    %752 = vmatprep.subr.bf16.mxu0 0
    %753 = vmatpush2.bf16.msra.mxu0 0
    %754 = vmatprep.subr.bf16.mxu0 0
    %755 = vmatpush2.bf16.msra.mxu0 0
    %756 = vmatprep.subr.bf16.mxu0 0
    %757 = vmatpush2.bf16.msra.mxu0 0
    %758 = vmatprep.subr.bf16.mxu0 0
    %759 = vmatpush2.bf16.msra.mxu0 0
    %760 = vmatprep.mubr.bf16.mxu0 0
    %761 = vmatmul.mubr.bf16.gmra.mxu0 %v686
    %v762 = vpop.f32.mrf.mxu0
    %v763 = vadd.f32 0.0, %v762
    %v764 = vpop.f32.mrf.mxu0
    %v765 = vadd.f32 0.0, %v764
    %v766 = vpop.f32.mrf.mxu0
    %v767 = vpop.f32.mrf.mxu0
    %768 = vdwg.mxu0
    %v773 = vrot.slane %v722, 7
    %v774 = vrot.slane %v724, 7
    %v775 = vrot.slane %v763, 7
    %v776 = vrot.slane %v765, 7
    %v781 = vadd.f32 %v334, %v773
    %v782 = vadd.f32 %v336, %v774
    %v783 = vadd.f32 %v375, %v775
    %v784 = vadd.f32 %v377, %v776
    %v785 = vxor.u32 %v781, 2147483648
    %v786 = vmul.f32 %v785, 1.442695
    %v787 = vpow.pop %v786
    %v788 = vadd.f32 %v787, 1.0
    %v789 = vrcp.pop %v788
    %v790 = vmul.f32 1.0, %v789
    %v791 = vxor.u32 %v782, 2147483648
    %v792 = vmul.f32 %v791, 1.442695
    %v793 = vpow.pop %v792
    %v794 = vadd.f32 %v793, 1.0
    %v795 = vrcp.pop %v794
    %v796 = vmul.f32 1.0, %v795
    %v797 = vtanh.pop %v783
    %v798 = vxor.u32 %v784, 2147483648
    %v799 = vmul.f32 %v798, 1.442695
    %v800 = vpow.pop %v799
    %v801 = vadd.f32 %v800, 1.0
    %v802 = vrcp.pop %v801
    %v803 = vmul.f32 1.0, %v802
    %v805 = vrot.slane %v683, 7
    %v807 = vmul.f32 %v796, %v805
    %v808 = vmul.f32 %v790, %v797
    %v809 = vadd.f32 %v807, %v808
    %v810 = vtanh.pop %v809
    %v811 = vmul.f32 %v803, %v810
    %v812 = vpack.c.bf16 %v811, %v811
    %v814 = vshrl.u32 %v812, 16
    %817 = vmatprep.subr.bf16.mxu0 %v541
    %818 = vmatpush1.bf16.msra.mxu0 %v540
    %819 = vmatprep.subr.bf16.mxu0 %v537
    %820 = vmatpush1.bf16.msra.mxu0 %v536
    %821 = vmatprep.subr.bf16.mxu0 %v533
    %822 = vmatpush1.bf16.msra.mxu0 %v532
    %823 = vmatprep.subr.bf16.mxu0 %v529
    %824 = vmatpush1.bf16.msra.mxu0 %v528
    %825 = vmatprep.subr.bf16.mxu0 %v525
    %826 = vmatpush1.bf16.msra.mxu0 %v524
    %827 = vmatprep.subr.bf16.mxu0 %v521
    %828 = vmatpush1.bf16.msra.mxu0 %v520
    %829 = vmatprep.subr.bf16.mxu0 %v517
    %830 = vmatpush1.bf16.msra.mxu0 %v516
    %831 = vmatprep.subr.bf16.mxu0 %v513
    %832 = vmatpush1.bf16.msra.mxu0 %v512
    %833 = vmatprep.subr.bf16.mxu0 0
    %834 = vmatpush2.bf16.msra.mxu0 0
    %835 = vmatprep.subr.bf16.mxu0 0
    %836 = vmatpush2.bf16.msra.mxu0 0
    %837 = vmatprep.subr.bf16.mxu0 0
    %838 = vmatpush2.bf16.msra.mxu0 0
    %839 = vmatprep.subr.bf16.mxu0 0
    %840 = vmatpush2.bf16.msra.mxu0 0
    %841 = vmatprep.subr.bf16.mxu0 0
    %842 = vmatpush2.bf16.msra.mxu0 0
    %843 = vmatprep.subr.bf16.mxu0 0
    %844 = vmatpush2.bf16.msra.mxu0 0
    %845 = vmatprep.subr.bf16.mxu0 0
    %846 = vmatpush2.bf16.msra.mxu0 0
    %847 = vmatprep.subr.bf16.mxu0 0
    %848 = vmatpush2.bf16.msra.mxu0 0
    %849 = vmatprep.mubr.bf16.mxu0 0
    %850 = vmatmul.mubr.bf16.gmra.mxu0 %v814
    %v851 = vpop.f32.mrf.mxu0
    %v852 = vadd.f32 0.0, %v851
    %v853 = vpop.f32.mrf.mxu0
    %v854 = vadd.f32 0.0, %v853
    %v855 = vpop.f32.mrf.mxu0
    %v856 = vpop.f32.mrf.mxu0
    %857 = vdwg.mxu0
    %858 = vmatprep.subr.bf16.mxu0 %v543
    %859 = vmatpush1.bf16.msra.mxu0 %v542
    %860 = vmatprep.subr.bf16.mxu0 %v539
    %861 = vmatpush1.bf16.msra.mxu0 %v538
    %862 = vmatprep.subr.bf16.mxu0 %v535
    %863 = vmatpush1.bf16.msra.mxu0 %v534
    %864 = vmatprep.subr.bf16.mxu0 %v531
    %865 = vmatpush1.bf16.msra.mxu0 %v530
    %866 = vmatprep.subr.bf16.mxu0 %v527
    %867 = vmatpush1.bf16.msra.mxu0 %v526
    %868 = vmatprep.subr.bf16.mxu0 %v523
    %869 = vmatpush1.bf16.msra.mxu0 %v522
    %870 = vmatprep.subr.bf16.mxu0 %v519
    %871 = vmatpush1.bf16.msra.mxu0 %v518
    %872 = vmatprep.subr.bf16.mxu0 %v515
    %873 = vmatpush1.bf16.msra.mxu0 %v514
    %874 = vmatprep.subr.bf16.mxu0 0
    %875 = vmatpush2.bf16.msra.mxu0 0
    %876 = vmatprep.subr.bf16.mxu0 0
    %877 = vmatpush2.bf16.msra.mxu0 0
    %878 = vmatprep.subr.bf16.mxu0 0
    %879 = vmatpush2.bf16.msra.mxu0 0
    %880 = vmatprep.subr.bf16.mxu0 0
    %881 = vmatpush2.bf16.msra.mxu0 0
    %882 = vmatprep.subr.bf16.mxu0 0
    %883 = vmatpush2.bf16.msra.mxu0 0
    %884 = vmatprep.subr.bf16.mxu0 0
    %885 = vmatpush2.bf16.msra.mxu0 0
    %886 = vmatprep.subr.bf16.mxu0 0
    %887 = vmatpush2.bf16.msra.mxu0 0
    %888 = vmatprep.subr.bf16.mxu0 0
    %889 = vmatpush2.bf16.msra.mxu0 0
    %890 = vmatprep.mubr.bf16.mxu0 0
    %891 = vmatmul.mubr.bf16.gmra.mxu0 %v814
    %v892 = vpop.f32.mrf.mxu0
    %v893 = vadd.f32 0.0, %v892
    %v894 = vpop.f32.mrf.mxu0
    %v895 = vadd.f32 0.0, %v894
    %v896 = vpop.f32.mrf.mxu0
    %v897 = vpop.f32.mrf.mxu0
    %898 = vdwg.mxu0
    %v903 = vrot.slane %v852, 6
    %v904 = vrot.slane %v854, 6
    %v905 = vrot.slane %v893, 6
    %v906 = vrot.slane %v895, 6
    %v911 = vadd.f32 %v334, %v903
    %v912 = vadd.f32 %v336, %v904
    %v913 = vadd.f32 %v375, %v905
    %v914 = vadd.f32 %v377, %v906
    %v915 = vxor.u32 %v911, 2147483648
    %v916 = vmul.f32 %v915, 1.442695
    %v917 = vpow.pop %v916
    %v918 = vadd.f32 %v917, 1.0
    %v919 = vrcp.pop %v918
    %v920 = vmul.f32 1.0, %v919
    %v921 = vxor.u32 %v912, 2147483648
    %v922 = vmul.f32 %v921, 1.442695
    %v923 = vpow.pop %v922
    %v924 = vadd.f32 %v923, 1.0
    %v925 = vrcp.pop %v924
    %v926 = vmul.f32 1.0, %v925
    %v927 = vtanh.pop %v913
    %v928 = vxor.u32 %v914, 2147483648
    %v929 = vmul.f32 %v928, 1.442695
    %v930 = vpow.pop %v929
    %v931 = vadd.f32 %v930, 1.0
    %v932 = vrcp.pop %v931
    %v933 = vmul.f32 1.0, %v932
    %v935 = vrot.slane %v809, 7
    %v937 = vmul.f32 %v926, %v935
    %v938 = vmul.f32 %v920, %v927
    %v939 = vadd.f32 %v937, %v938
    %v940 = vtanh.pop %v939
    %v941 = vmul.f32 %v933, %v940
    %v942 = vpack.c.bf16 %v941, %v941
    %v944 = vrot.slane %v942, 1
    %946 = vmatprep.subr.bf16.mxu0 %v541
    %947 = vmatpush1.bf16.msra.mxu0 %v540
    %948 = vmatprep.subr.bf16.mxu0 %v537
    %949 = vmatpush1.bf16.msra.mxu0 %v536
    %950 = vmatprep.subr.bf16.mxu0 %v533
    %951 = vmatpush1.bf16.msra.mxu0 %v532
    %952 = vmatprep.subr.bf16.mxu0 %v529
    %953 = vmatpush1.bf16.msra.mxu0 %v528
    %954 = vmatprep.subr.bf16.mxu0 %v525
    %955 = vmatpush1.bf16.msra.mxu0 %v524
    %956 = vmatprep.subr.bf16.mxu0 %v521
    %957 = vmatpush1.bf16.msra.mxu0 %v520
    %958 = vmatprep.subr.bf16.mxu0 %v517
    %959 = vmatpush1.bf16.msra.mxu0 %v516
    %960 = vmatprep.subr.bf16.mxu0 %v513
    %961 = vmatpush1.bf16.msra.mxu0 %v512
    %962 = vmatprep.subr.bf16.mxu0 0
    %963 = vmatpush2.bf16.msra.mxu0 0
    %964 = vmatprep.subr.bf16.mxu0 0
    %965 = vmatpush2.bf16.msra.mxu0 0
    %966 = vmatprep.subr.bf16.mxu0 0
    %967 = vmatpush2.bf16.msra.mxu0 0
    %968 = vmatprep.subr.bf16.mxu0 0
    %969 = vmatpush2.bf16.msra.mxu0 0
    %970 = vmatprep.subr.bf16.mxu0 0
    %971 = vmatpush2.bf16.msra.mxu0 0
    %972 = vmatprep.subr.bf16.mxu0 0
    %973 = vmatpush2.bf16.msra.mxu0 0
    %974 = vmatprep.subr.bf16.mxu0 0
    %975 = vmatpush2.bf16.msra.mxu0 0
    %976 = vmatprep.subr.bf16.mxu0 0
    %977 = vmatpush2.bf16.msra.mxu0 0
    %978 = vmatprep.mubr.bf16.mxu0 0
    %979 = vmatmul.mubr.bf16.gmra.mxu0 %v944
    %v980 = vpop.f32.mrf.mxu0
    %v981 = vadd.f32 0.0, %v980
    %v982 = vpop.f32.mrf.mxu0
    %v983 = vadd.f32 0.0, %v982
    %v984 = vpop.f32.mrf.mxu0
    %v985 = vpop.f32.mrf.mxu0
    %986 = vdwg.mxu0
    %987 = vmatprep.subr.bf16.mxu0 %v543
    %988 = vmatpush1.bf16.msra.mxu0 %v542
    %989 = vmatprep.subr.bf16.mxu0 %v539
    %990 = vmatpush1.bf16.msra.mxu0 %v538
    %991 = vmatprep.subr.bf16.mxu0 %v535
    %992 = vmatpush1.bf16.msra.mxu0 %v534
    %993 = vmatprep.subr.bf16.mxu0 %v531
    %994 = vmatpush1.bf16.msra.mxu0 %v530
    %995 = vmatprep.subr.bf16.mxu0 %v527
    %996 = vmatpush1.bf16.msra.mxu0 %v526
    %997 = vmatprep.subr.bf16.mxu0 %v523
    %998 = vmatpush1.bf16.msra.mxu0 %v522
    %999 = vmatprep.subr.bf16.mxu0 %v519
    %1000 = vmatpush1.bf16.msra.mxu0 %v518
    %1001 = vmatprep.subr.bf16.mxu0 %v515
    %1002 = vmatpush1.bf16.msra.mxu0 %v514
    %1003 = vmatprep.subr.bf16.mxu0 0
    %1004 = vmatpush2.bf16.msra.mxu0 0
    %1005 = vmatprep.subr.bf16.mxu0 0
    %1006 = vmatpush2.bf16.msra.mxu0 0
    %1007 = vmatprep.subr.bf16.mxu0 0
    %1008 = vmatpush2.bf16.msra.mxu0 0
    %1009 = vmatprep.subr.bf16.mxu0 0
    %1010 = vmatpush2.bf16.msra.mxu0 0
    %1011 = vmatprep.subr.bf16.mxu0 0
    %1012 = vmatpush2.bf16.msra.mxu0 0
    %1013 = vmatprep.subr.bf16.mxu0 0
    %1014 = vmatpush2.bf16.msra.mxu0 0
    %1015 = vmatprep.subr.bf16.mxu0 0
    %1016 = vmatpush2.bf16.msra.mxu0 0
    %1017 = vmatprep.subr.bf16.mxu0 0
    %1018 = vmatpush2.bf16.msra.mxu0 0
    %1019 = vmatprep.mubr.bf16.mxu0 0
    %1020 = vmatmul.mubr.bf16.gmra.mxu0 %v944
    %v1021 = vpop.f32.mrf.mxu0
    %v1022 = vadd.f32 0.0, %v1021
    %v1023 = vpop.f32.mrf.mxu0
    %v1024 = vadd.f32 0.0, %v1023
    %v1025 = vpop.f32.mrf.mxu0
    %v1026 = vpop.f32.mrf.mxu0
    %1027 = vdwg.mxu0
    %v1032 = vrot.slane %v981, 5
    %v1033 = vrot.slane %v983, 5
    %v1034 = vrot.slane %v1022, 5
    %v1035 = vrot.slane %v1024, 5
    %v1040 = vadd.f32 %v334, %v1032
    %v1041 = vadd.f32 %v336, %v1033
    %v1042 = vadd.f32 %v375, %v1034
    %v1043 = vadd.f32 %v377, %v1035
    %v1044 = vxor.u32 %v1040, 2147483648
    %v1045 = vmul.f32 %v1044, 1.442695
    %v1046 = vpow.pop %v1045
    %v1047 = vadd.f32 %v1046, 1.0
    %v1048 = vrcp.pop %v1047
    %v1049 = vmul.f32 1.0, %v1048
    %v1050 = vxor.u32 %v1041, 2147483648
    %v1051 = vmul.f32 %v1050, 1.442695
    %v1052 = vpow.pop %v1051
    %v1053 = vadd.f32 %v1052, 1.0
    %v1054 = vrcp.pop %v1053
    %v1055 = vmul.f32 1.0, %v1054
    %v1056 = vtanh.pop %v1042
    %v1057 = vxor.u32 %v1043, 2147483648
    %v1058 = vmul.f32 %v1057, 1.442695
    %v1059 = vpow.pop %v1058
    %v1060 = vadd.f32 %v1059, 1.0
    %v1061 = vrcp.pop %v1060
    %v1062 = vmul.f32 1.0, %v1061
    %v1064 = vrot.slane %v939, 7
    %v1066 = vmul.f32 %v1055, %v1064
    %v1067 = vmul.f32 %v1049, %v1056
    %v1068 = vadd.f32 %v1066, %v1067
    %v1069 = vtanh.pop %v1068
    %v1070 = vmul.f32 %v1062, %v1069
    %v1071 = vpack.c.bf16 %v1070, %v1070
    %v1073 = vshrl.u32 %v1071, 16
    %v1075 = vrot.slane %v1073, 1
    %1077 = vmatprep.subr.bf16.mxu0 %v541
    %1078 = vmatpush1.bf16.msra.mxu0 %v540
    %1079 = vmatprep.subr.bf16.mxu0 %v537
    %1080 = vmatpush1.bf16.msra.mxu0 %v536
    %1081 = vmatprep.subr.bf16.mxu0 %v533
    %1082 = vmatpush1.bf16.msra.mxu0 %v532
    %1083 = vmatprep.subr.bf16.mxu0 %v529
    %1084 = vmatpush1.bf16.msra.mxu0 %v528
    %1085 = vmatprep.subr.bf16.mxu0 %v525
    %1086 = vmatpush1.bf16.msra.mxu0 %v524
    %1087 = vmatprep.subr.bf16.mxu0 %v521
    %1088 = vmatpush1.bf16.msra.mxu0 %v520
    %1089 = vmatprep.subr.bf16.mxu0 %v517
    %1090 = vmatpush1.bf16.msra.mxu0 %v516
    %1091 = vmatprep.subr.bf16.mxu0 %v513
    %1092 = vmatpush1.bf16.msra.mxu0 %v512
    %1093 = vmatprep.subr.bf16.mxu0 0
    %1094 = vmatpush2.bf16.msra.mxu0 0
    %1095 = vmatprep.subr.bf16.mxu0 0
    %1096 = vmatpush2.bf16.msra.mxu0 0
    %1097 = vmatprep.subr.bf16.mxu0 0
    %1098 = vmatpush2.bf16.msra.mxu0 0
    %1099 = vmatprep.subr.bf16.mxu0 0
    %1100 = vmatpush2.bf16.msra.mxu0 0
    %1101 = vmatprep.subr.bf16.mxu0 0
    %1102 = vmatpush2.bf16.msra.mxu0 0
    %1103 = vmatprep.subr.bf16.mxu0 0
    %1104 = vmatpush2.bf16.msra.mxu0 0
    %1105 = vmatprep.subr.bf16.mxu0 0
    %1106 = vmatpush2.bf16.msra.mxu0 0
    %1107 = vmatprep.subr.bf16.mxu0 0
    %1108 = vmatpush2.bf16.msra.mxu0 0
    %1109 = vmatprep.mubr.bf16.mxu0 0
    %1110 = vmatmul.mubr.bf16.gmra.mxu0 %v1075
    %v1111 = vpop.f32.mrf.mxu0
    %v1112 = vadd.f32 0.0, %v1111
    %v1113 = vpop.f32.mrf.mxu0
    %v1114 = vadd.f32 0.0, %v1113
    %v1115 = vpop.f32.mrf.mxu0
    %v1116 = vpop.f32.mrf.mxu0
    %1117 = vdwg.mxu0
    %1118 = vmatprep.subr.bf16.mxu0 %v543
    %1119 = vmatpush1.bf16.msra.mxu0 %v542
    %1120 = vmatprep.subr.bf16.mxu0 %v539
    %1121 = vmatpush1.bf16.msra.mxu0 %v538
    %1122 = vmatprep.subr.bf16.mxu0 %v535
    %1123 = vmatpush1.bf16.msra.mxu0 %v534
    %1124 = vmatprep.subr.bf16.mxu0 %v531
    %1125 = vmatpush1.bf16.msra.mxu0 %v530
    %1126 = vmatprep.subr.bf16.mxu0 %v527
    %1127 = vmatpush1.bf16.msra.mxu0 %v526
    %1128 = vmatprep.subr.bf16.mxu0 %v523
    %1129 = vmatpush1.bf16.msra.mxu0 %v522
    %1130 = vmatprep.subr.bf16.mxu0 %v519
    %1131 = vmatpush1.bf16.msra.mxu0 %v518
    %1132 = vmatprep.subr.bf16.mxu0 %v515
    %1133 = vmatpush1.bf16.msra.mxu0 %v514
    %1134 = vmatprep.subr.bf16.mxu0 0
    %1135 = vmatpush2.bf16.msra.mxu0 0
    %1136 = vmatprep.subr.bf16.mxu0 0
    %1137 = vmatpush2.bf16.msra.mxu0 0
    %1138 = vmatprep.subr.bf16.mxu0 0
    %1139 = vmatpush2.bf16.msra.mxu0 0
    %1140 = vmatprep.subr.bf16.mxu0 0
    %1141 = vmatpush2.bf16.msra.mxu0 0
    %1142 = vmatprep.subr.bf16.mxu0 0
    %1143 = vmatpush2.bf16.msra.mxu0 0
    %1144 = vmatprep.subr.bf16.mxu0 0
    %1145 = vmatpush2.bf16.msra.mxu0 0
    %1146 = vmatprep.subr.bf16.mxu0 0
    %1147 = vmatpush2.bf16.msra.mxu0 0
    %1148 = vmatprep.subr.bf16.mxu0 0
    %1149 = vmatpush2.bf16.msra.mxu0 0
    %1150 = vmatprep.mubr.bf16.mxu0 0
    %1151 = vmatmul.mubr.bf16.gmra.mxu0 %v1075
    %v1152 = vpop.f32.mrf.mxu0
    %v1153 = vadd.f32 0.0, %v1152
    %v1154 = vpop.f32.mrf.mxu0
    %v1155 = vadd.f32 0.0, %v1154
    %v1156 = vpop.f32.mrf.mxu0
    %v1157 = vpop.f32.mrf.mxu0
    %1158 = vdwg.mxu0
    %v1163 = vrot.slane %v1112, 4
    %v1164 = vrot.slane %v1114, 4
    %v1165 = vrot.slane %v1153, 4
    %v1166 = vrot.slane %v1155, 4
    %v1171 = vadd.f32 %v334, %v1163
    %v1172 = vadd.f32 %v336, %v1164
    %v1173 = vadd.f32 %v375, %v1165
    %v1174 = vadd.f32 %v377, %v1166
    %v1175 = vxor.u32 %v1171, 2147483648
    %v1176 = vmul.f32 %v1175, 1.442695
    %v1177 = vpow.pop %v1176
    %v1178 = vadd.f32 %v1177, 1.0
    %v1179 = vrcp.pop %v1178
    %v1180 = vmul.f32 1.0, %v1179
    %v1181 = vxor.u32 %v1172, 2147483648
    %v1182 = vmul.f32 %v1181, 1.442695
    %v1183 = vpow.pop %v1182
    %v1184 = vadd.f32 %v1183, 1.0
    %v1185 = vrcp.pop %v1184
    %v1186 = vmul.f32 1.0, %v1185
    %v1187 = vtanh.pop %v1173
    %v1188 = vxor.u32 %v1174, 2147483648
    %v1189 = vmul.f32 %v1188, 1.442695
    %v1190 = vpow.pop %v1189
    %v1191 = vadd.f32 %v1190, 1.0
    %v1192 = vrcp.pop %v1191
    %v1193 = vmul.f32 1.0, %v1192
    %v1195 = vrot.slane %v1068, 7
    %v1197 = vmul.f32 %v1186, %v1195
    %v1198 = vmul.f32 %v1180, %v1187
    %v1199 = vadd.f32 %v1197, %v1198
    %v1200 = vtanh.pop %v1199
    %v1201 = vmul.f32 %v1193, %v1200
    %v1202 = vpack.c.bf16 %v1201, %v1201
    %v1204 = vrot.slane %v1202, 2
    %1206 = vmatprep.subr.bf16.mxu0 %v541
    %1207 = vmatpush1.bf16.msra.mxu0 %v540
    %1208 = vmatprep.subr.bf16.mxu0 %v537
    %1209 = vmatpush1.bf16.msra.mxu0 %v536
    %1210 = vmatprep.subr.bf16.mxu0 %v533
    %1211 = vmatpush1.bf16.msra.mxu0 %v532
    %1212 = vmatprep.subr.bf16.mxu0 %v529
    %1213 = vmatpush1.bf16.msra.mxu0 %v528
    %1214 = vmatprep.subr.bf16.mxu0 %v525
    %1215 = vmatpush1.bf16.msra.mxu0 %v524
    %1216 = vmatprep.subr.bf16.mxu0 %v521
    %1217 = vmatpush1.bf16.msra.mxu0 %v520
    %1218 = vmatprep.subr.bf16.mxu0 %v517
    %1219 = vmatpush1.bf16.msra.mxu0 %v516
    %1220 = vmatprep.subr.bf16.mxu0 %v513
    %1221 = vmatpush1.bf16.msra.mxu0 %v512
    %1222 = vmatprep.subr.bf16.mxu0 0
    %1223 = vmatpush2.bf16.msra.mxu0 0
    %1224 = vmatprep.subr.bf16.mxu0 0
    %1225 = vmatpush2.bf16.msra.mxu0 0
    %1226 = vmatprep.subr.bf16.mxu0 0
    %1227 = vmatpush2.bf16.msra.mxu0 0
    %1228 = vmatprep.subr.bf16.mxu0 0
    %1229 = vmatpush2.bf16.msra.mxu0 0
    %1230 = vmatprep.subr.bf16.mxu0 0
    %1231 = vmatpush2.bf16.msra.mxu0 0
    %1232 = vmatprep.subr.bf16.mxu0 0
    %1233 = vmatpush2.bf16.msra.mxu0 0
    %1234 = vmatprep.subr.bf16.mxu0 0
    %1235 = vmatpush2.bf16.msra.mxu0 0
    %1236 = vmatprep.subr.bf16.mxu0 0
    %1237 = vmatpush2.bf16.msra.mxu0 0
    %1238 = vmatprep.mubr.bf16.mxu0 0
    %1239 = vmatmul.mubr.bf16.gmra.mxu0 %v1204
    %v1240 = vpop.f32.mrf.mxu0
    %v1241 = vadd.f32 0.0, %v1240
    %v1242 = vpop.f32.mrf.mxu0
    %v1243 = vadd.f32 0.0, %v1242
    %v1244 = vpop.f32.mrf.mxu0
    %v1245 = vpop.f32.mrf.mxu0
    %1246 = vdwg.mxu0
    %1247 = vmatprep.subr.bf16.mxu0 %v543
    %1248 = vmatpush1.bf16.msra.mxu0 %v542
    %1249 = vmatprep.subr.bf16.mxu0 %v539
    %1250 = vmatpush1.bf16.msra.mxu0 %v538
    %1251 = vmatprep.subr.bf16.mxu0 %v535
    %1252 = vmatpush1.bf16.msra.mxu0 %v534
    %1253 = vmatprep.subr.bf16.mxu0 %v531
    %1254 = vmatpush1.bf16.msra.mxu0 %v530
    %1255 = vmatprep.subr.bf16.mxu0 %v527
    %1256 = vmatpush1.bf16.msra.mxu0 %v526
    %1257 = vmatprep.subr.bf16.mxu0 %v523
    %1258 = vmatpush1.bf16.msra.mxu0 %v522
    %1259 = vmatprep.subr.bf16.mxu0 %v519
    %1260 = vmatpush1.bf16.msra.mxu0 %v518
    %1261 = vmatprep.subr.bf16.mxu0 %v515
    %1262 = vmatpush1.bf16.msra.mxu0 %v514
    %1263 = vmatprep.subr.bf16.mxu0 0
    %1264 = vmatpush2.bf16.msra.mxu0 0
    %1265 = vmatprep.subr.bf16.mxu0 0
    %1266 = vmatpush2.bf16.msra.mxu0 0
    %1267 = vmatprep.subr.bf16.mxu0 0
    %1268 = vmatpush2.bf16.msra.mxu0 0
    %1269 = vmatprep.subr.bf16.mxu0 0
    %1270 = vmatpush2.bf16.msra.mxu0 0
    %1271 = vmatprep.subr.bf16.mxu0 0
    %1272 = vmatpush2.bf16.msra.mxu0 0
    %1273 = vmatprep.subr.bf16.mxu0 0
    %1274 = vmatpush2.bf16.msra.mxu0 0
    %1275 = vmatprep.subr.bf16.mxu0 0
    %1276 = vmatpush2.bf16.msra.mxu0 0
    %1277 = vmatprep.subr.bf16.mxu0 0
    %1278 = vmatpush2.bf16.msra.mxu0 0
    %1279 = vmatprep.mubr.bf16.mxu0 0
    %1280 = vmatmul.mubr.bf16.gmra.mxu0 %v1204
    %v1281 = vpop.f32.mrf.mxu0
    %v1282 = vadd.f32 0.0, %v1281
    %v1283 = vpop.f32.mrf.mxu0
    %v1284 = vadd.f32 0.0, %v1283
    %v1285 = vpop.f32.mrf.mxu0
    %v1286 = vpop.f32.mrf.mxu0
    %1287 = vdwg.mxu0
    %v1292 = vrot.slane %v1241, 3
    %v1293 = vrot.slane %v1243, 3
    %v1294 = vrot.slane %v1282, 3
    %v1295 = vrot.slane %v1284, 3
    %v1300 = vadd.f32 %v334, %v1292
    %v1301 = vadd.f32 %v336, %v1293
    %v1302 = vadd.f32 %v375, %v1294
    %v1303 = vadd.f32 %v377, %v1295
    %v1304 = vxor.u32 %v1300, 2147483648
    %v1305 = vmul.f32 %v1304, 1.442695
    %v1306 = vpow.pop %v1305
    %v1307 = vadd.f32 %v1306, 1.0
    %v1308 = vrcp.pop %v1307
    %v1309 = vmul.f32 1.0, %v1308
    %v1310 = vxor.u32 %v1301, 2147483648
    %v1311 = vmul.f32 %v1310, 1.442695
    %v1312 = vpow.pop %v1311
    %v1313 = vadd.f32 %v1312, 1.0
    %v1314 = vrcp.pop %v1313
    %v1315 = vmul.f32 1.0, %v1314
    %v1316 = vtanh.pop %v1302
    %v1317 = vxor.u32 %v1303, 2147483648
    %v1318 = vmul.f32 %v1317, 1.442695
    %v1319 = vpow.pop %v1318
    %v1320 = vadd.f32 %v1319, 1.0
    %v1321 = vrcp.pop %v1320
    %v1322 = vmul.f32 1.0, %v1321
    %v1324 = vrot.slane %v1199, 7
    %v1326 = vmul.f32 %v1315, %v1324
    %v1327 = vmul.f32 %v1309, %v1316
    %v1328 = vadd.f32 %v1326, %v1327
    %v1329 = vtanh.pop %v1328
    %v1330 = vmul.f32 %v1322, %v1329
    %v1331 = vpack.c.bf16 %v1330, %v1330
    %v1333 = vshrl.u32 %v1331, 16
    %v1335 = vrot.slane %v1333, 2
    %1337 = vmatprep.subr.bf16.mxu0 %v541
    %1338 = vmatpush1.bf16.msra.mxu0 %v540
    %1339 = vmatprep.subr.bf16.mxu0 %v537
    %1340 = vmatpush1.bf16.msra.mxu0 %v536
    %1341 = vmatprep.subr.bf16.mxu0 %v533
    %1342 = vmatpush1.bf16.msra.mxu0 %v532
    %1343 = vmatprep.subr.bf16.mxu0 %v529
    %1344 = vmatpush1.bf16.msra.mxu0 %v528
    %1345 = vmatprep.subr.bf16.mxu0 %v525
    %1346 = vmatpush1.bf16.msra.mxu0 %v524
    %1347 = vmatprep.subr.bf16.mxu0 %v521
    %1348 = vmatpush1.bf16.msra.mxu0 %v520
    %1349 = vmatprep.subr.bf16.mxu0 %v517
    %1350 = vmatpush1.bf16.msra.mxu0 %v516
    %1351 = vmatprep.subr.bf16.mxu0 %v513
    %1352 = vmatpush1.bf16.msra.mxu0 %v512
    %1353 = vmatprep.subr.bf16.mxu0 0
    %1354 = vmatpush2.bf16.msra.mxu0 0
    %1355 = vmatprep.subr.bf16.mxu0 0
    %1356 = vmatpush2.bf16.msra.mxu0 0
    %1357 = vmatprep.subr.bf16.mxu0 0
    %1358 = vmatpush2.bf16.msra.mxu0 0
    %1359 = vmatprep.subr.bf16.mxu0 0
    %1360 = vmatpush2.bf16.msra.mxu0 0
    %1361 = vmatprep.subr.bf16.mxu0 0
    %1362 = vmatpush2.bf16.msra.mxu0 0
    %1363 = vmatprep.subr.bf16.mxu0 0
    %1364 = vmatpush2.bf16.msra.mxu0 0
    %1365 = vmatprep.subr.bf16.mxu0 0
    %1366 = vmatpush2.bf16.msra.mxu0 0
    %1367 = vmatprep.subr.bf16.mxu0 0
    %1368 = vmatpush2.bf16.msra.mxu0 0
    %1369 = vmatprep.mubr.bf16.mxu0 0
    %1370 = vmatmul.mubr.bf16.gmra.mxu0 %v1335
    %v1371 = vpop.f32.mrf.mxu0
    %v1372 = vadd.f32 0.0, %v1371
    %v1373 = vpop.f32.mrf.mxu0
    %v1374 = vadd.f32 0.0, %v1373
    %v1375 = vpop.f32.mrf.mxu0
    %v1376 = vpop.f32.mrf.mxu0
    %1377 = vdwg.mxu0
    %1378 = vmatprep.subr.bf16.mxu0 %v543
    %1379 = vmatpush1.bf16.msra.mxu0 %v542
    %1380 = vmatprep.subr.bf16.mxu0 %v539
    %1381 = vmatpush1.bf16.msra.mxu0 %v538
    %1382 = vmatprep.subr.bf16.mxu0 %v535
    %1383 = vmatpush1.bf16.msra.mxu0 %v534
    %1384 = vmatprep.subr.bf16.mxu0 %v531
    %1385 = vmatpush1.bf16.msra.mxu0 %v530
    %1386 = vmatprep.subr.bf16.mxu0 %v527
    %1387 = vmatpush1.bf16.msra.mxu0 %v526
    %1388 = vmatprep.subr.bf16.mxu0 %v523
    %1389 = vmatpush1.bf16.msra.mxu0 %v522
    %1390 = vmatprep.subr.bf16.mxu0 %v519
    %1391 = vmatpush1.bf16.msra.mxu0 %v518
    %1392 = vmatprep.subr.bf16.mxu0 %v515
    %1393 = vmatpush1.bf16.msra.mxu0 %v514
    %1394 = vmatprep.subr.bf16.mxu0 0
    %1395 = vmatpush2.bf16.msra.mxu0 0
    %1396 = vmatprep.subr.bf16.mxu0 0
    %1397 = vmatpush2.bf16.msra.mxu0 0
    %1398 = vmatprep.subr.bf16.mxu0 0
    %1399 = vmatpush2.bf16.msra.mxu0 0
    %1400 = vmatprep.subr.bf16.mxu0 0
    %1401 = vmatpush2.bf16.msra.mxu0 0
    %1402 = vmatprep.subr.bf16.mxu0 0
    %1403 = vmatpush2.bf16.msra.mxu0 0
    %1404 = vmatprep.subr.bf16.mxu0 0
    %1405 = vmatpush2.bf16.msra.mxu0 0
    %1406 = vmatprep.subr.bf16.mxu0 0
    %1407 = vmatpush2.bf16.msra.mxu0 0
    %1408 = vmatprep.subr.bf16.mxu0 0
    %1409 = vmatpush2.bf16.msra.mxu0 0
    %1410 = vmatprep.mubr.bf16.mxu0 0
    %1411 = vmatmul.mubr.bf16.gmra.mxu0 %v1335
    %v1412 = vpop.f32.mrf.mxu0
    %v1413 = vadd.f32 0.0, %v1412
    %v1414 = vpop.f32.mrf.mxu0
    %v1415 = vadd.f32 0.0, %v1414
    %v1416 = vpop.f32.mrf.mxu0
    %v1417 = vpop.f32.mrf.mxu0
    %1418 = vdwg.mxu0
    %v1423 = vrot.slane %v1372, 2
    %v1424 = vrot.slane %v1374, 2
    %v1425 = vrot.slane %v1413, 2
    %v1426 = vrot.slane %v1415, 2
    %v1431 = vadd.f32 %v334, %v1423
    %v1432 = vadd.f32 %v336, %v1424
    %v1433 = vadd.f32 %v375, %v1425
    %v1434 = vadd.f32 %v377, %v1426
    %v1435 = vxor.u32 %v1431, 2147483648
    %v1436 = vmul.f32 %v1435, 1.442695
    %v1437 = vpow.pop %v1436
    %v1438 = vadd.f32 %v1437, 1.0
    %v1439 = vrcp.pop %v1438
    %v1440 = vmul.f32 1.0, %v1439
    %v1441 = vxor.u32 %v1432, 2147483648
    %v1442 = vmul.f32 %v1441, 1.442695
    %v1443 = vpow.pop %v1442
    %v1444 = vadd.f32 %v1443, 1.0
    %v1445 = vrcp.pop %v1444
    %v1446 = vmul.f32 1.0, %v1445
    %v1447 = vtanh.pop %v1433
    %v1448 = vxor.u32 %v1434, 2147483648
    %v1449 = vmul.f32 %v1448, 1.442695
    %v1450 = vpow.pop %v1449
    %v1451 = vadd.f32 %v1450, 1.0
    %v1452 = vrcp.pop %v1451
    %v1453 = vmul.f32 1.0, %v1452
    %v1455 = vrot.slane %v1328, 7
    %v1457 = vmul.f32 %v1446, %v1455
    %v1458 = vmul.f32 %v1440, %v1447
    %v1459 = vadd.f32 %v1457, %v1458
    %v1460 = vtanh.pop %v1459
    %v1461 = vmul.f32 %v1453, %v1460
    %v1462 = vpack.c.bf16 %v1461, %v1461
    %v1464 = vrot.slane %v1462, 3
    %1466 = vmatprep.subr.bf16.mxu0 %v541
    %1467 = vmatpush1.bf16.msra.mxu0 %v540
    %1468 = vmatprep.subr.bf16.mxu0 %v537
    %1469 = vmatpush1.bf16.msra.mxu0 %v536
    %1470 = vmatprep.subr.bf16.mxu0 %v533
    %1471 = vmatpush1.bf16.msra.mxu0 %v532
    %1472 = vmatprep.subr.bf16.mxu0 %v529
    %1473 = vmatpush1.bf16.msra.mxu0 %v528
    %1474 = vmatprep.subr.bf16.mxu0 %v525
    %1475 = vmatpush1.bf16.msra.mxu0 %v524
    %1476 = vmatprep.subr.bf16.mxu0 %v521
    %1477 = vmatpush1.bf16.msra.mxu0 %v520
    %1478 = vmatprep.subr.bf16.mxu0 %v517
    %1479 = vmatpush1.bf16.msra.mxu0 %v516
    %1480 = vmatprep.subr.bf16.mxu0 %v513
    %1481 = vmatpush1.bf16.msra.mxu0 %v512
    %1482 = vmatprep.subr.bf16.mxu0 0
    %1483 = vmatpush2.bf16.msra.mxu0 0
    %1484 = vmatprep.subr.bf16.mxu0 0
    %1485 = vmatpush2.bf16.msra.mxu0 0
    %1486 = vmatprep.subr.bf16.mxu0 0
    %1487 = vmatpush2.bf16.msra.mxu0 0
    %1488 = vmatprep.subr.bf16.mxu0 0
    %1489 = vmatpush2.bf16.msra.mxu0 0
    %1490 = vmatprep.subr.bf16.mxu0 0
    %1491 = vmatpush2.bf16.msra.mxu0 0
    %1492 = vmatprep.subr.bf16.mxu0 0
    %1493 = vmatpush2.bf16.msra.mxu0 0
    %1494 = vmatprep.subr.bf16.mxu0 0
    %1495 = vmatpush2.bf16.msra.mxu0 0
    %1496 = vmatprep.subr.bf16.mxu0 0
    %1497 = vmatpush2.bf16.msra.mxu0 0
    %1498 = vmatprep.mubr.bf16.mxu0 0
    %1499 = vmatmul.mubr.bf16.gmra.mxu0 %v1464
    %v1500 = vpop.f32.mrf.mxu0
    %v1501 = vadd.f32 0.0, %v1500
    %v1502 = vpop.f32.mrf.mxu0
    %v1503 = vadd.f32 0.0, %v1502
    %v1504 = vpop.f32.mrf.mxu0
    %v1505 = vpop.f32.mrf.mxu0
    %1506 = vdwg.mxu0
    %1507 = vmatprep.subr.bf16.mxu0 %v543
    %1508 = vmatpush1.bf16.msra.mxu0 %v542
    %1509 = vmatprep.subr.bf16.mxu0 %v539
    %1510 = vmatpush1.bf16.msra.mxu0 %v538
    %1511 = vmatprep.subr.bf16.mxu0 %v535
    %1512 = vmatpush1.bf16.msra.mxu0 %v534
    %1513 = vmatprep.subr.bf16.mxu0 %v531
    %1514 = vmatpush1.bf16.msra.mxu0 %v530
    %1515 = vmatprep.subr.bf16.mxu0 %v527
    %1516 = vmatpush1.bf16.msra.mxu0 %v526
    %1517 = vmatprep.subr.bf16.mxu0 %v523
    %1518 = vmatpush1.bf16.msra.mxu0 %v522
    %1519 = vmatprep.subr.bf16.mxu0 %v519
    %1520 = vmatpush1.bf16.msra.mxu0 %v518
    %1521 = vmatprep.subr.bf16.mxu0 %v515
    %1522 = vmatpush1.bf16.msra.mxu0 %v514
    %1523 = vmatprep.subr.bf16.mxu0 0
    %1524 = vmatpush2.bf16.msra.mxu0 0
    %1525 = vmatprep.subr.bf16.mxu0 0
    %1526 = vmatpush2.bf16.msra.mxu0 0
    %1527 = vmatprep.subr.bf16.mxu0 0
    %1528 = vmatpush2.bf16.msra.mxu0 0
    %1529 = vmatprep.subr.bf16.mxu0 0
    %1530 = vmatpush2.bf16.msra.mxu0 0
    %1531 = vmatprep.subr.bf16.mxu0 0
    %1532 = vmatpush2.bf16.msra.mxu0 0
    %1533 = vmatprep.subr.bf16.mxu0 0
    %1534 = vmatpush2.bf16.msra.mxu0 0
    %1535 = vmatprep.subr.bf16.mxu0 0
    %1536 = vmatpush2.bf16.msra.mxu0 0
    %1537 = vmatprep.subr.bf16.mxu0 0
    %1538 = vmatpush2.bf16.msra.mxu0 0
    %1539 = vmatprep.mubr.bf16.mxu0 0
    %1540 = vmatmul.mubr.bf16.gmra.mxu0 %v1464
    %v1541 = vpop.f32.mrf.mxu0
    %v1542 = vadd.f32 0.0, %v1541
    %v1543 = vpop.f32.mrf.mxu0
    %v1544 = vadd.f32 0.0, %v1543
    %v1545 = vpop.f32.mrf.mxu0
    %v1546 = vpop.f32.mrf.mxu0
    %1547 = vdwg.mxu0
    %v1552 = vrot.slane %v1501, 1
    %v1553 = vrot.slane %v1503, 1
    %v1554 = vrot.slane %v1542, 1
    %v1555 = vrot.slane %v1544, 1
    %v1560 = vadd.f32 %v334, %v1552
    %v1561 = vadd.f32 %v336, %v1553
    %v1562 = vadd.f32 %v375, %v1554
    %v1563 = vadd.f32 %v377, %v1555
    %v1564 = vxor.u32 %v1560, 2147483648
    %v1565 = vmul.f32 %v1564, 1.442695
    %v1566 = vpow.pop %v1565
    %v1567 = vadd.f32 %v1566, 1.0
    %v1568 = vrcp.pop %v1567
    %v1569 = vmul.f32 1.0, %v1568
    %v1570 = vxor.u32 %v1561, 2147483648
    %v1571 = vmul.f32 %v1570, 1.442695
    %v1572 = vpow.pop %v1571
    %v1573 = vadd.f32 %v1572, 1.0
    %v1574 = vrcp.pop %v1573
    %v1575 = vmul.f32 1.0, %v1574
    %v1576 = vtanh.pop %v1562
    %v1577 = vxor.u32 %v1563, 2147483648
    %v1578 = vmul.f32 %v1577, 1.442695
    %v1579 = vpow.pop %v1578
    %v1580 = vadd.f32 %v1579, 1.0
    %v1581 = vrcp.pop %v1580
    %v1582 = vmul.f32 1.0, %v1581
    %v1584 = vrot.slane %v1459, 7
    %v1586 = vmul.f32 %v1575, %v1584
    %v1587 = vmul.f32 %v1569, %v1576
    %v1588 = vadd.f32 %v1586, %v1587
    %v1589 = vtanh.pop %v1588
    %v1590 = vmul.f32 %v1582, %v1589
    %v1591 = vpack.c.bf16 %v1590, %v1590
    %v1592 = vld [vmem:[#allocation8] sm:$0xf]
    %v1593 = vld [vmem:[#allocation8 + $0x4] sm:$0xf]
    %v1594 = vld [vmem:[#allocation8 + $0x8] sm:$0xf]
    %v1595 = vld [vmem:[#allocation8 + $0xc] sm:$0xf]
    %v1596 = vld [vmem:[#allocation8 + $0x10] sm:$0xf]
    %v1597 = vld [vmem:[#allocation8 + $0x14] sm:$0xf]
    %v1598 = vld [vmem:[#allocation8 + $0x18] sm:$0xf]
    %v1599 = vld [vmem:[#allocation8 + $0x1c] sm:$0xf]
    %v1600 = vld [vmem:[#allocation8 + $0x20] sm:$0xf]
    %v1601 = vld [vmem:[#allocation8 + $0x24] sm:$0xf]
    %v1602 = vld [vmem:[#allocation8 + $0x28] sm:$0xf]
    %v1603 = vld [vmem:[#allocation8 + $0x2c] sm:$0xf]
    %v1604 = vld [vmem:[#allocation8 + $0x30] sm:$0xf]
    %v1605 = vld [vmem:[#allocation8 + $0x34] sm:$0xf]
    %v1606 = vld [vmem:[#allocation8 + $0x38] sm:$0xf]
    %v1607 = vld [vmem:[#allocation8 + $0x3c] sm:$0xf]
    %v1608 = vld [vmem:[%s7] sm:$0x1]
    %v1610 = vshrl.u32 %v1591, 16
    %v1612 = vrot.slane %v1610, 3
    %v1630 = vunpack.c.l.b16 %v1592
    %v1631 = vunpack.c.l.b16 %v1593
    %v1632 = vunpack.c.l.b16 %v1594
    %v1633 = vunpack.c.l.b16 %v1595
    %v1634 = vunpack.c.l.b16 %v1596
    %v1635 = vunpack.c.l.b16 %v1597
    %v1636 = vunpack.c.l.b16 %v1598
    %v1637 = vunpack.c.l.b16 %v1599
    %v1638 = vunpack.c.l.b16 %v1600
    %v1639 = vunpack.c.l.b16 %v1601
    %v1640 = vunpack.c.l.b16 %v1602
    %v1641 = vunpack.c.l.b16 %v1603
    %v1642 = vunpack.c.l.b16 %v1604
    %v1643 = vunpack.c.l.b16 %v1605
    %v1644 = vunpack.c.l.b16 %v1606
    %v1645 = vunpack.c.l.b16 %v1607
    %v1646 = vpack.c.b16 %v1631, %v1630
    %v1647 = vpack.c.b16 %v1633, %v1632
    %v1648 = vpack.c.b16 %v1635, %v1634
    %v1649 = vpack.c.b16 %v1637, %v1636
    %v1650 = vpack.c.b16 %v1639, %v1638
    %v1651 = vpack.c.b16 %v1641, %v1640
    %v1652 = vpack.c.b16 %v1643, %v1642
    %v1653 = vpack.c.b16 %v1645, %v1644
    %1662 = vmatprep.subr.bf16.mxu0 0
    %1663 = vmatpush1.bf16.msra.mxu0 %v1653
    %1664 = vmatprep.subr.bf16.mxu0 0
    %1665 = vmatpush1.bf16.msra.mxu0 %v1652
    %1666 = vmatprep.subr.bf16.mxu0 0
    %1667 = vmatpush1.bf16.msra.mxu0 %v1651
    %1668 = vmatprep.subr.bf16.mxu0 0
    %1669 = vmatpush1.bf16.msra.mxu0 %v1650
    %1670 = vmatprep.subr.bf16.mxu0 0
    %1671 = vmatpush1.bf16.msra.mxu0 %v1649
    %1672 = vmatprep.subr.bf16.mxu0 0
    %1673 = vmatpush1.bf16.msra.mxu0 %v1648
    %1674 = vmatprep.subr.bf16.mxu0 0
    %1675 = vmatpush1.bf16.msra.mxu0 %v1647
    %1676 = vmatprep.subr.bf16.mxu0 0
    %1677 = vmatpush1.bf16.msra.mxu0 %v1646
    %1678 = vmatprep.subr.bf16.mxu0 0
    %1679 = vmatpush2.bf16.msra.mxu0 0
    %1680 = vmatprep.subr.bf16.mxu0 0
    %1681 = vmatpush2.bf16.msra.mxu0 0
    %1682 = vmatprep.subr.bf16.mxu0 0
    %1683 = vmatpush2.bf16.msra.mxu0 0
    %1684 = vmatprep.subr.bf16.mxu0 0
    %1685 = vmatpush2.bf16.msra.mxu0 0
    %1686 = vmatprep.subr.bf16.mxu0 0
    %1687 = vmatpush2.bf16.msra.mxu0 0
    %1688 = vmatprep.subr.bf16.mxu0 0
    %1689 = vmatpush2.bf16.msra.mxu0 0
    %1690 = vmatprep.subr.bf16.mxu0 0
    %1691 = vmatpush2.bf16.msra.mxu0 0
    %1692 = vmatprep.subr.bf16.mxu0 0
    %1693 = vmatpush2.bf16.msra.mxu0 0
    %1694 = vmatprep.mubr.bf16.mxu0 0
    %1695 = vmatmul.mubr.bf16.gmra.mxu0 %v1612
    %v1696 = vpop.f32.mrf.mxu0
    %v1697 = vadd.f32 %v1608, %v1696
    %v1698 = vpop.f32.mrf.mxu0
    %v1699 = vpop.f32.mrf.mxu0
    %v1700 = vpop.f32.mrf.mxu0
    %1701 = vdwg.mxu0
    %1702 = vst [vmem:[#allocation10] sm:$0x1] %v1697
    // Predicated region
    $region50: #{tpu_custom_call.1} parent=1 // pred_check
      _
    $region51: #{tpu_custom_call.1} parent=1 // pred_check_branch
      %1704 = sbr.rel (0) target = $region53
    $region52: #{tpu_custom_call.1} parent=1 // pred_region
      %s1706 = ssub.s32 16, 16
      %1707 = vsyncadd [#allocation4], %s1706
      %s1709 = sshll.u32 [#allocation10], 4
      %s1710 = int_to_ptr.vmem [resolvable:$true] %s1709
      %1712 = dma.vmem_to_hbm [thread:$0]  %s1710, 16, %s8, [#allocation4]
    $region53: #{tpu_custom_call.1} parent=1 // pred_fallthru
      _
    // Predicated region
    $region54: #{tpu_custom_call.1} parent=1 // pred_check
      _
    $region55: #{tpu_custom_call.1} parent=1 // pred_check_branch
      %1714 = sbr.rel (0) target = $region57
    $region56: #{tpu_custom_call.1} parent=1 // pred_region
      %1715 = dma.done [#allocation4], 16
    $region57: #{tpu_custom_call.1} parent=1 // pred_fallthru
      _
    %1716 = vsyncpa [#allocation3], 1
    %1717 = vsyncpa [#allocation6], 1
    %1718 = vsyncpa [#allocation9], 1
    %1719 = vsyncpa [#allocation4], 1

</llo_original>
